<compile_context>
chip_gen: v7x
topology: tpu7x:2x2x1
jax: 0.10.0
libtpu: 0.0.40
codegen_flags: <defaults>
</compile_context>

<pallas_src>
import functools

import jax
import jax.numpy as jnp
import numpy as np
from jax.experimental import pallas as pl
from jax.experimental.pallas import tpu as pltpu


def _same_pad_amounts(size, k, stride, dilation=1):
    """Replicates conv2d_same_padding's padding math for one spatial dim."""
    eff_k = (k - 1) * dilation + 1
    out = (size + stride - 1) // stride
    pad = max(0, (out - 1) * stride + eff_k - size)
    return out, pad // 2, pad - pad // 2  # (out_size, pad_lo, pad_hi)


# ---------------------------------------------------------------------------
# Fused Pallas kernel: conv (im2col matmul) + train-mode BN + ReLU
# ---------------------------------------------------------------------------
def _fused_convblock_kernel(x_ref, w_ref, gamma_ref, beta_ref, o_ref, *,
                            batch, kh_size, kw_size, oh, ow, sh, sw, dh, dw, eps):
    """
    x_ref:     (N, Cin, Hp, Wp)   SAME-padded NCHW input (compute dtype)
    w_ref:     (Cout, KH*KW*Cin)  im2col weight matrix (compute dtype)
    gamma_ref: (Cout, 1)          f32
    beta_ref:  (Cout, 1)          f32
    o_ref:     (N, Cout, OH*OW)   f32 flattened-NCHW output
    """
    ohw = oh * ow
    cin = x_ref.shape[1]
    k = kh_size * kw_size * cin

    # im2col (all in VMEM): taps stacked along the leading (sublane-group) axis
    # (cheap), spatial flattened to the lane axis with one reshape per batch element.
    cols = []
    for b in range(batch):                      # small static batch, unrolled
        x_b = x_ref[b].astype(jnp.float32)      # (Cin, Hp, Wp)
        taps = []
        for kh in range(kh_size):
            r0 = kh * dh
            for kw in range(kw_size):
                c0 = kw * dw
                taps.append(
                    x_b[:, r0: r0 + (oh - 1) * sh + 1: sh,
                           c0: c0 + (ow - 1) * sw + 1: sw])       # (Cin, OH, OW)
        cols.append(jnp.concatenate(taps, axis=0).reshape(k, ohw))  # (K, OH*OW)
    patches = cols[0] if batch == 1 else jnp.concatenate(cols, axis=-1)  # (K, N*OHW)

    # Single MXU matmul, f32 accumulation (MXU inputs in compute dtype, e.g. bf16).
    y = jnp.dot(w_ref[...], patches.astype(w_ref.dtype),
                preferred_element_type=jnp.float32)               # (Cout, N*OHW)

    # Training-mode BatchNorm (two-pass, f32, biased variance) + ReLU, all on the
    # VMEM-resident activation.  Conv bias is omitted: it cancels exactly here.
    mean = jnp.mean(y, axis=1, keepdims=True)                     # (Cout, 1)
    centred = y - mean
    var = jnp.mean(centred * centred, axis=1, keepdims=True)      # (Cout, 1)
    scale = gamma_ref[...] * jax.lax.rsqrt(var + eps)             # EUP rsqrt
    out = jnp.maximum(centred * scale + beta_ref[...], 0.0)       # (Cout, N*OHW)

    # Lane-dense stores of flattened NCHW output.
    for b in range(batch):
        o_ref[b] = out[:, b * ohw:(b + 1) * ohw].astype(o_ref.dtype)


# ---------------------------------------------------------------------------
# Wrapper (NCHW in / NCHW out, like the PyTorch module)
# ---------------------------------------------------------------------------
def conv_block_forward(x_nchw, weight_oihw, bias, gamma, beta, *,
                       stride=(1, 1), dilation=(1, 1), eps=1e-5,
                       compute_dtype=jnp.float32):
    # Conv bias cancels exactly under the training-mode BatchNorm that follows.
    del bias

    n, cin, h, w = x_nchw.shape
    cout, _, kh, kw = weight_oihw.shape
    sh, sw = stride
    dh, dw = dilation

    oh, pt, pb = _same_pad_amounts(h, kh, sh, dh)
    ow, pleft, pright = _same_pad_amounts(w, kw, sw, dw)

    # Glue: SAME padding (stays NCHW -> no layout transpose anywhere) and the
    # OIHW -> (Cout, KH*KW*Cin) im2col weight matrix.  MXU inputs in compute_dtype
    # (bf16 on v6e/v7x halves HBM traffic); accumulation & BN math stay f32.
    x_pad = jnp.pad(x_nchw.astype(compute_dtype),
                    ((0, 0), (0, 0), (pt, pb), (pleft, pright)))
    hp, wp = x_pad.shape[2], x_pad.shape[3]
    w_mat = jnp.transpose(weight_oihw, (0, 2, 3, 1)).reshape(cout, kh * kw * cin)
    w_mat = w_mat.astype(compute_dtype)
    gamma2 = gamma.reshape(cout, 1).astype(jnp.float32)
    beta2 = beta.reshape(cout, 1).astype(jnp.float32)

    kernel = functools.partial(
        _fused_convblock_kernel, batch=n, kh_size=kh, kw_size=kw,
        oh=oh, ow=ow, sh=sh, sw=sw, dh=dh, dw=dw, eps=eps)

    fused = pl.pallas_call(
        kernel,
        out_shape=jax.ShapeDtypeStruct((n, cout, oh * ow), jnp.float32),
        # Whole small batch in one grid step (BN needs cross-batch stats anyway).
        # For a real multi-step grid on v7x, make the batch axis "parallel".
        grid=(1,),
        in_specs=[pl.BlockSpec((n, cin, hp, wp), lambda i: (0, 0, 0, 0)),
                  pl.BlockSpec((cout, kh * kw * cin), lambda i: (0, 0)),
                  pl.BlockSpec((cout, 1), lambda i: (0, 0)),
                  pl.BlockSpec((cout, 1), lambda i: (0, 0))],
        out_specs=pl.BlockSpec((n, cout, oh * ow), lambda i: (0, 0, 0)),
        compiler_params=pltpu.CompilerParams(dimension_semantics=("arbitrary",)),
    )
    y = fused(x_pad, w_mat, gamma2, beta2)                 # (N, Cout, OH*OW)

    # TODO(synk): nn.Dropout (train mode) is stochastic; applied as identity here.
    return y.reshape(n, cout, oh, ow)                      # already NCHW (free reshape)


# ---------------------------------------------------------------------------
# Pure-JAX reference for correctness check
# ---------------------------------------------------------------------------
def _reference(x_nchw, weight_oihw, bias, gamma, beta, *,
               stride=(1, 1), dilation=(1, 1), eps=1e-5,
               compute_dtype=jnp.float32):
    n, cin, h, w = x_nchw.shape
    cout, _, kh, kw = weight_oihw.shape
    # Quantize MXU inputs the same way the kernel does (no-op for f32).
    x32 = x_nchw.astype(compute_dtype).astype(jnp.float32)
    w32 = weight_oihw.astype(compute_dtype).astype(jnp.float32)
    _, pt, pb = _same_pad_amounts(h, kh, stride[0], dilation[0])
    _, pleft, pright = _same_pad_amounts(w, kw, stride[1], dilation[1])
    y = jax.lax.conv_general_dilated(
        x32, w32, window_strides=stride,
        padding=((pt, pb), (pleft, pright)),
        rhs_dilation=dilation,
        dimension_numbers=("NCHW", "OIHW", "NCHW"))
    y = y + bias[None, :, None, None]
    mean = jnp.mean(y, axis=(0, 2, 3), keepdims=True)
    var = jnp.mean((y - mean) ** 2, axis=(0, 2, 3), keepdims=True)   # biased var
    y = (y - mean) / jnp.sqrt(var + eps)
    y = y * gamma[None, :, None, None] + beta[None, :, None, None]
    return jnp.maximum(y, 0.0)


if __name__ == "__main__":
    # ConvBlock(in_channels=4, out_channels=8, kernel_size=3, stride=1, dropout=0.5)
    N, CIN, H, W = 2, 4, 16, 16
    COUT, KH, KW = 8, 3, 3
    STRIDE = (1, 1)

    key = jax.random.PRNGKey(0)
    kx, kw_, kb, kg, kbt = jax.random.split(key, 5)
    x = jax.random.normal(kx, (N, CIN, H, W), dtype=jnp.float32)
    weight = jax.random.normal(kw_, (COUT, CIN, KH, KW), dtype=jnp.float32) * 0.1
    bias = jax.random.normal(kb, (COUT,), dtype=jnp.float32) * 0.1
    gamma = 1.0 + 0.1 * jnp.arange(COUT, dtype=jnp.float32)
    beta = 0.05 * jnp.arange(COUT, dtype=jnp.float32)

    # f32 path (tight check).
    out = jax.block_until_ready(
        conv_block_forward(x, weight, bias, gamma, beta, stride=STRIDE))
    ref = jax.block_until_ready(
        _reference(x, weight, bias, gamma, beta, stride=STRIDE))
    np.testing.assert_allclose(np.asarray(out), np.asarray(ref), rtol=1e-4, atol=1e-4)

    # bf16 MXU-input path (v6e/v7x production setting; f32 accumulation + epilogue).
    out_bf = jax.block_until_ready(
        conv_block_forward(x, weight, bias, gamma, beta, stride=STRIDE,
                           compute_dtype=jnp.bfloat16))
    ref_bf = jax.block_until_ready(
        _reference(x, weight, bias, gamma, beta, stride=STRIDE,
                   compute_dtype=jnp.bfloat16))
    np.testing.assert_allclose(np.asarray(out_bf), np.asarray(ref_bf),
                               rtol=2e-2, atol=2e-2)

    print("KERNEL_OK")
</pallas_src>

<mosaic_0001>
module attributes {stable_mosaic.version = 11 : i64} {
  func.func @_fused_convblock_kernel(%arg0: i32, %arg1: memref<2x4x18x18xf32, #tpu.memory_space<vmem>>, %arg2: memref<8x36xf32, #tpu.memory_space<vmem>>, %arg3: memref<8x1xf32, #tpu.memory_space<vmem>>, %arg4: memref<8x1xf32, #tpu.memory_space<vmem>>, %arg5: memref<2x8x256xf32, #tpu.memory_space<vmem>>) attributes {dimension_semantics = [#tpu.dimension_semantics<arbitrary>], iteration_bounds = array<i64: 1>, scalar_prefetch = 0 : i64, scratch_operands = 0 : i64, tpu.core_type = #tpu.core_type<tc>, window_params = [{pipeline_mode = #tpu.pipeline_mode<synchronous>, transform_indices = @transform_0, window_bounds = array<i64: 2, 4, 18, 18>}, {pipeline_mode = #tpu.pipeline_mode<synchronous>, transform_indices = @transform_1, window_bounds = array<i64: 8, 36>}, {pipeline_mode = #tpu.pipeline_mode<synchronous>, transform_indices = @transform_2, window_bounds = array<i64: 8, 1>}, {pipeline_mode = #tpu.pipeline_mode<synchronous>, transform_indices = @transform_3, window_bounds = array<i64: 8, 1>}, {pipeline_mode = #tpu.pipeline_mode<synchronous>, transform_indices = @transform_4, window_bounds = array<i64: 2, 8, 256>}]} {
    %c0 = arith.constant 0 : index
    %c0_0 = arith.constant 0 : index
    %c0_1 = arith.constant 0 : index
    %c0_2 = arith.constant 0 : index
    %0 = vector.load %arg1[%c0, %c0_0, %c0_1, %c0_2] : memref<2x4x18x18xf32, #tpu.memory_space<vmem>>, vector<1x4x18x18xf32>
    %1 = vector.shape_cast %0 : vector<1x4x18x18xf32> to vector<4x18x18xf32>
    %2 = vector.extract_strided_slice %1 {offsets = [0, 0, 0], sizes = [4, 16, 16], strides = [1, 1, 1]} : vector<4x18x18xf32> to vector<4x16x16xf32>
    %3 = vector.extract_strided_slice %1 {offsets = [0, 0, 1], sizes = [4, 16, 16], strides = [1, 1, 1]} : vector<4x18x18xf32> to vector<4x16x16xf32>
    %4 = vector.extract_strided_slice %1 {offsets = [0, 0, 2], sizes = [4, 16, 16], strides = [1, 1, 1]} : vector<4x18x18xf32> to vector<4x16x16xf32>
    %5 = vector.extract_strided_slice %1 {offsets = [0, 1, 0], sizes = [4, 16, 16], strides = [1, 1, 1]} : vector<4x18x18xf32> to vector<4x16x16xf32>
    %6 = vector.extract_strided_slice %1 {offsets = [0, 1, 1], sizes = [4, 16, 16], strides = [1, 1, 1]} : vector<4x18x18xf32> to vector<4x16x16xf32>
    %7 = vector.extract_strided_slice %1 {offsets = [0, 1, 2], sizes = [4, 16, 16], strides = [1, 1, 1]} : vector<4x18x18xf32> to vector<4x16x16xf32>
    %8 = vector.extract_strided_slice %1 {offsets = [0, 2, 0], sizes = [4, 16, 16], strides = [1, 1, 1]} : vector<4x18x18xf32> to vector<4x16x16xf32>
    %9 = vector.extract_strided_slice %1 {offsets = [0, 2, 1], sizes = [4, 16, 16], strides = [1, 1, 1]} : vector<4x18x18xf32> to vector<4x16x16xf32>
    %10 = vector.extract_strided_slice %1 {offsets = [0, 2, 2], sizes = [4, 16, 16], strides = [1, 1, 1]} : vector<4x18x18xf32> to vector<4x16x16xf32>
    %11 = tpu.concatenate %2, %3, %4, %5, %6, %7, %8, %9, %10 in 0 : vector<4x16x16xf32>, vector<4x16x16xf32>, vector<4x16x16xf32>, vector<4x16x16xf32>, vector<4x16x16xf32>, vector<4x16x16xf32>, vector<4x16x16xf32>, vector<4x16x16xf32>, vector<4x16x16xf32> -> vector<36x16x16xf32>
    %12 = vector.shape_cast %11 : vector<36x16x16xf32> to vector<36x256xf32>
    %c1 = arith.constant 1 : index
    %c0_3 = arith.constant 0 : index
    %c0_4 = arith.constant 0 : index
    %c0_5 = arith.constant 0 : index
    %13 = vector.load %arg1[%c1, %c0_3, %c0_4, %c0_5] : memref<2x4x18x18xf32, #tpu.memory_space<vmem>>, vector<1x4x18x18xf32>
    %14 = vector.shape_cast %13 : vector<1x4x18x18xf32> to vector<4x18x18xf32>
    %15 = vector.extract_strided_slice %14 {offsets = [0, 0, 0], sizes = [4, 16, 16], strides = [1, 1, 1]} : vector<4x18x18xf32> to vector<4x16x16xf32>
    %16 = vector.extract_strided_slice %14 {offsets = [0, 0, 1], sizes = [4, 16, 16], strides = [1, 1, 1]} : vector<4x18x18xf32> to vector<4x16x16xf32>
    %17 = vector.extract_strided_slice %14 {offsets = [0, 0, 2], sizes = [4, 16, 16], strides = [1, 1, 1]} : vector<4x18x18xf32> to vector<4x16x16xf32>
    %18 = vector.extract_strided_slice %14 {offsets = [0, 1, 0], sizes = [4, 16, 16], strides = [1, 1, 1]} : vector<4x18x18xf32> to vector<4x16x16xf32>
    %19 = vector.extract_strided_slice %14 {offsets = [0, 1, 1], sizes = [4, 16, 16], strides = [1, 1, 1]} : vector<4x18x18xf32> to vector<4x16x16xf32>
    %20 = vector.extract_strided_slice %14 {offsets = [0, 1, 2], sizes = [4, 16, 16], strides = [1, 1, 1]} : vector<4x18x18xf32> to vector<4x16x16xf32>
    %21 = vector.extract_strided_slice %14 {offsets = [0, 2, 0], sizes = [4, 16, 16], strides = [1, 1, 1]} : vector<4x18x18xf32> to vector<4x16x16xf32>
    %22 = vector.extract_strided_slice %14 {offsets = [0, 2, 1], sizes = [4, 16, 16], strides = [1, 1, 1]} : vector<4x18x18xf32> to vector<4x16x16xf32>
    %23 = vector.extract_strided_slice %14 {offsets = [0, 2, 2], sizes = [4, 16, 16], strides = [1, 1, 1]} : vector<4x18x18xf32> to vector<4x16x16xf32>
    %24 = tpu.concatenate %15, %16, %17, %18, %19, %20, %21, %22, %23 in 0 : vector<4x16x16xf32>, vector<4x16x16xf32>, vector<4x16x16xf32>, vector<4x16x16xf32>, vector<4x16x16xf32>, vector<4x16x16xf32>, vector<4x16x16xf32>, vector<4x16x16xf32>, vector<4x16x16xf32> -> vector<36x16x16xf32>
    %25 = vector.shape_cast %24 : vector<36x16x16xf32> to vector<36x256xf32>
    %26 = tpu.concatenate %12, %25 in 1 : vector<36x256xf32>, vector<36x256xf32> -> vector<36x512xf32>
    %c0_6 = arith.constant 0 : index
    %c0_7 = arith.constant 0 : index
    %27 = vector.load %arg2[%c0_6, %c0_7] : memref<8x36xf32, #tpu.memory_space<vmem>>, vector<8x36xf32>
    %cst = arith.constant dense<0.000000e+00> : vector<8x512xf32>
    %28 = tpu.matmul %27, %26, %cst {dimension_numbers = #tpu.dot_dimension_numbers<[1], [0], [0], [1], [0, 0, 1, 1], [], []>} : vector<8x36xf32>, vector<36x512xf32>, vector<8x512xf32> -> vector<8x512xf32>
    %cst_8 = arith.constant dense<0.000000e+00> : vector<8xf32>
    %29 = vector.multi_reduction <add>, %28, %cst_8 [1] : vector<8x512xf32> to vector<8xf32>
    %30 = vector.shape_cast %29 : vector<8xf32> to vector<8x1xf32>
    %cst_9 = arith.constant 5.120000e+02 : f32
    %31 = vector.broadcast %cst_9 : f32 to vector<8x1xf32>
    %32 = arith.divf %30, %31 : vector<8x1xf32>
    %33 = vector.broadcast %32 : vector<8x1xf32> to vector<8x512xf32>
    %34 = arith.subf %28, %33 : vector<8x512xf32>
    %35 = arith.mulf %34, %34 : vector<8x512xf32>
    %cst_10 = arith.constant dense<0.000000e+00> : vector<8xf32>
    %36 = vector.multi_reduction <add>, %35, %cst_10 [1] : vector<8x512xf32> to vector<8xf32>
    %37 = vector.shape_cast %36 : vector<8xf32> to vector<8x1xf32>
    %cst_11 = arith.constant 5.120000e+02 : f32
    %38 = vector.broadcast %cst_11 : f32 to vector<8x1xf32>
    %39 = arith.divf %37, %38 : vector<8x1xf32>
    %c0_12 = arith.constant 0 : index
    %c0_13 = arith.constant 0 : index
    %40 = vector.load %arg3[%c0_12, %c0_13] : memref<8x1xf32, #tpu.memory_space<vmem>>, vector<8x1xf32>
    %cst_14 = arith.constant 9.99999974E-6 : f32
    %41 = vector.broadcast %cst_14 : f32 to vector<8x1xf32>
    %42 = arith.addf %39, %41 : vector<8x1xf32>
    %43 = math.rsqrt %42 : vector<8x1xf32>
    %44 = arith.mulf %40, %43 : vector<8x1xf32>
    %45 = vector.broadcast %44 : vector<8x1xf32> to vector<8x512xf32>
    %46 = arith.mulf %34, %45 : vector<8x512xf32>
    %c0_15 = arith.constant 0 : index
    %c0_16 = arith.constant 0 : index
    %47 = vector.load %arg4[%c0_15, %c0_16] : memref<8x1xf32, #tpu.memory_space<vmem>>, vector<8x1xf32>
    %48 = vector.broadcast %47 : vector<8x1xf32> to vector<8x512xf32>
    %49 = arith.addf %46, %48 : vector<8x512xf32>
    %cst_17 = arith.constant 0.000000e+00 : f32
    %50 = vector.broadcast %cst_17 : f32 to vector<8x512xf32>
    %51 = arith.maximumf %49, %50 : vector<8x512xf32>
    %52 = vector.extract_strided_slice %51 {offsets = [0, 0], sizes = [8, 256], strides = [1, 1]} : vector<8x512xf32> to vector<8x256xf32>
    %c0_18 = arith.constant 0 : index
    %c0_19 = arith.constant 0 : index
    %c0_20 = arith.constant 0 : index
    %53 = vector.load %arg5[%c0_18, %c0_19, %c0_20] : memref<2x8x256xf32, #tpu.memory_space<vmem>>, vector<1x8x256xf32>
    %54 = vector.shape_cast %53 : vector<1x8x256xf32> to vector<8x256xf32>
    %55 = vector.shape_cast %52 : vector<8x256xf32> to vector<1x8x256xf32>
    tpu.vector_store %arg5[%c0_18, %c0_19, %c0_20], %55 {strides = array<i32>} : memref<2x8x256xf32, #tpu.memory_space<vmem>>, vector<1x8x256xf32>,
    %56 = vector.extract_strided_slice %51 {offsets = [0, 256], sizes = [8, 256], strides = [1, 1]} : vector<8x512xf32> to vector<8x256xf32>
    %c1_21 = arith.constant 1 : index
    %c0_22 = arith.constant 0 : index
    %c0_23 = arith.constant 0 : index
    %57 = vector.load %arg5[%c1_21, %c0_22, %c0_23] : memref<2x8x256xf32, #tpu.memory_space<vmem>>, vector<1x8x256xf32>
    %58 = vector.shape_cast %57 : vector<1x8x256xf32> to vector<8x256xf32>
    %59 = vector.shape_cast %56 : vector<8x256xf32> to vector<1x8x256xf32>
    tpu.vector_store %arg5[%c1_21, %c0_22, %c0_23], %59 {strides = array<i32>} : memref<2x8x256xf32, #tpu.memory_space<vmem>>, vector<1x8x256xf32>,
    return
  }
  func.func @transform_0(%arg0: i32) -> (i32, i32, i32, i32) {
    %c0_i32 = arith.constant 0 : i32
    %c0_i32_0 = arith.constant 0 : i32
    %c0_i32_1 = arith.constant 0 : i32
    %c0_i32_2 = arith.constant 0 : i32
    %c0_i32_3 = arith.constant 0 : i32
    return %c0_i32, %c0_i32_0, %c0_i32_1, %c0_i32_2 : i32, i32, i32, i32
  }
  func.func @transform_1(%arg0: i32) -> (i32, i32) {
    %c0_i32 = arith.constant 0 : i32
    %c0_i32_0 = arith.constant 0 : i32
    %c0_i32_1 = arith.constant 0 : i32
    return %c0_i32, %c0_i32_0 : i32, i32
  }
  func.func @transform_2(%arg0: i32) -> (i32, i32) {
    %c0_i32 = arith.constant 0 : i32
    %c0_i32_0 = arith.constant 0 : i32
    %c0_i32_1 = arith.constant 0 : i32
    return %c0_i32, %c0_i32_0 : i32, i32
  }
  func.func @transform_3(%arg0: i32) -> (i32, i32) {
    %c0_i32 = arith.constant 0 : i32
    %c0_i32_0 = arith.constant 0 : i32
    %c0_i32_1 = arith.constant 0 : i32
    return %c0_i32, %c0_i32_0 : i32, i32
  }
  func.func @transform_4(%arg0: i32) -> (i32, i32, i32) {
    %c0_i32 = arith.constant 0 : i32
    %c0_i32_0 = arith.constant 0 : i32
    %c0_i32_1 = arith.constant 0 : i32
    %c0_i32_2 = arith.constant 0 : i32
    return %c0_i32, %c0_i32_0, %c0_i32_1 : i32, i32, i32
  }
}

</mosaic_0001>

<llo_original>
// kernel: tpu_custom_call.1
$region0: #{tpu_custom_call.1}
  #allocation0 [shape = 'u32[]', space=smem, size = 0x4, offset = 0x4, fixed_abs, tag = 'smem constant byte address 0x4 - core index']
  #allocation1 [shape = 'u32[144,128]{1,0:T(1,128)}', space=vmem, size = 0x12000, scoped, tag = 'internal scratch']
  %s0 = inlined_call_operand.vmem [shape: f32[2,4,18,18], index: 0, kind: input, shape index: {}]
  %s1 = inlined_call_operand.vmem [shape: f32[8,36], index: 1, kind: input, shape index: {}]
  %s2 = inlined_call_operand.vmem [shape: f32[8,1], index: 2, kind: input, shape index: {}]
  %s3 = inlined_call_operand.vmem [shape: f32[8,1], index: 3, kind: input, shape index: {}]
  %s4 = inlined_call_operand.hbm [shape: f32[2,8,256], index: 4, kind: output, shape index: {}]
  %s5 = sld [smem:[#allocation0]]
  $region26: #{tpu_custom_call.1} parent=0
    _
  %s7 = ssub.s32 1, %s5
  %s8 = scalar_select 0, %s7, %s5
  $region1: #{tpu_custom_call.1} parent=0
    #allocation2 [shape = 'u8[16384]{0}', space=vmem, size = 0x4000, scoped, tag = 'output window, operand 0, single buffered']
    #allocation3 [shape = 's32[1]{0}', space=sflag, size = 0x4, scoped, tag = 'scoped memory for tpu_custom_call.1']
    %9 = vsyncpa [#allocation3], 0
    // Predicated region
    $region2: #{tpu_custom_call.1} parent=1 // pred_check
      _
    $region3: #{tpu_custom_call.1} parent=1 // pred_check_branch
      %11 = sbr.rel (0) target = $region5
    $region4: #{tpu_custom_call.1} parent=1 // pred_region
      _
    $region5: #{tpu_custom_call.1} parent=1 // pred_fallthru
      _
    // Predicated region
    $region6: #{tpu_custom_call.1} parent=1 // pred_check
      _
    $region7: #{tpu_custom_call.1} parent=1 // pred_check_branch
      %13 = sbr.rel (0) target = $region9
    $region8: #{tpu_custom_call.1} parent=1 // pred_region
      _
    $region9: #{tpu_custom_call.1} parent=1 // pred_fallthru
      _
    // Predicated region
    $region10: #{tpu_custom_call.1} parent=1 // pred_check
      _
    $region11: #{tpu_custom_call.1} parent=1 // pred_check_branch
      %15 = sbr.rel (0) target = $region13
    $region12: #{tpu_custom_call.1} parent=1 // pred_region
      _
    $region13: #{tpu_custom_call.1} parent=1 // pred_fallthru
      _
    // Predicated region
    $region14: #{tpu_custom_call.1} parent=1 // pred_check
      _
    $region15: #{tpu_custom_call.1} parent=1 // pred_check_branch
      %17 = sbr.rel (0) target = $region17
    $region16: #{tpu_custom_call.1} parent=1 // pred_region
      _
    $region17: #{tpu_custom_call.1} parent=1 // pred_fallthru
      _
    %v18 = vld [vmem:[%s0] sm:$0xff]
    %v19 = vld [vmem:[%s0 + $0x8] sm:$0xff]
    %v20 = vld [vmem:[%s0 + $0x10] sm:$0x3]
    %v21 = vld [vmem:[%s0 + $0x18] sm:$0xff]
    %v22 = vld [vmem:[%s0 + $0x20] sm:$0xff]
    %v23 = vld [vmem:[%s0 + $0x28] sm:$0x3]
    %v24 = vld [vmem:[%s0 + $0x30] sm:$0xff]
    %v25 = vld [vmem:[%s0 + $0x38] sm:$0xff]
    %v26 = vld [vmem:[%s0 + $0x40] sm:$0x3]
    %v27 = vld [vmem:[%s0 + $0x48] sm:$0xff]
    %v28 = vld [vmem:[%s0 + $0x50] sm:$0xff]
    %v29 = vld [vmem:[%s0 + $0x58] sm:$0x3]
    %38 = vrot.lane.b32.xlu0 %v18, 127
    %v39 = vpop.permute.xlu0 %38
    %40 = vrot.lane.b32.xlu0 %v19, 127
    %v41 = vpop.permute.xlu0 %40
    %42 = vrot.lane.b32.xlu0 %v21, 127
    %v43 = vpop.permute.xlu0 %42
    %44 = vrot.lane.b32.xlu0 %v22, 127
    %v45 = vpop.permute.xlu0 %44
    %46 = vrot.lane.b32.xlu0 %v24, 127
    %v47 = vpop.permute.xlu0 %46
    %48 = vrot.lane.b32.xlu0 %v25, 127
    %v49 = vpop.permute.xlu0 %48
    %50 = vrot.lane.b32.xlu0 %v27, 127
    %v51 = vpop.permute.xlu0 %50
    %52 = vrot.lane.b32.xlu0 %v28, 127
    %v53 = vpop.permute.xlu0 %52
    %62 = vrot.lane.b32.xlu0 %v18, 126
    %v63 = vpop.permute.xlu0 %62
    %64 = vrot.lane.b32.xlu0 %v19, 126
    %v65 = vpop.permute.xlu0 %64
    %66 = vrot.lane.b32.xlu0 %v21, 126
    %v67 = vpop.permute.xlu0 %66
    %68 = vrot.lane.b32.xlu0 %v22, 126
    %v69 = vpop.permute.xlu0 %68
    %70 = vrot.lane.b32.xlu0 %v24, 126
    %v71 = vpop.permute.xlu0 %70
    %72 = vrot.lane.b32.xlu0 %v25, 126
    %v73 = vpop.permute.xlu0 %72
    %74 = vrot.lane.b32.xlu0 %v27, 126
    %v75 = vpop.permute.xlu0 %74
    %76 = vrot.lane.b32.xlu0 %v28, 126
    %v77 = vpop.permute.xlu0 %76
    %vm90 = vcmask 1046528
    %v91 = vrot.slane %v18, 1
    %v92 = vrot.slane %v19, 1
    %v93 = vsel %vm90, %v91, %v92
    %v94 = vrot.slane %v20, 1
    %v95 = vsel %vm90, %v92, %v94
    %v96 = vrot.slane %v21, 1
    %v97 = vrot.slane %v22, 1
    %v98 = vsel %vm90, %v96, %v97
    %v99 = vrot.slane %v23, 1
    %v100 = vsel %vm90, %v97, %v99
    %v101 = vrot.slane %v24, 1
    %v102 = vrot.slane %v25, 1
    %v103 = vsel %vm90, %v101, %v102
    %v104 = vrot.slane %v26, 1
    %v105 = vsel %vm90, %v102, %v104
    %v106 = vrot.slane %v27, 1
    %v107 = vrot.slane %v28, 1
    %v108 = vsel %vm90, %v106, %v107
    %v109 = vrot.slane %v29, 1
    %v110 = vsel %vm90, %v107, %v109
    %119 = vrot.lane.b32.xlu0 %v93, 127
    %v120 = vpop.permute.xlu0 %119
    %121 = vrot.lane.b32.xlu0 %v95, 127
    %v122 = vpop.permute.xlu0 %121
    %123 = vrot.lane.b32.xlu0 %v98, 127
    %v124 = vpop.permute.xlu0 %123
    %125 = vrot.lane.b32.xlu0 %v100, 127
    %v126 = vpop.permute.xlu0 %125
    %127 = vrot.lane.b32.xlu0 %v103, 127
    %v128 = vpop.permute.xlu0 %127
    %129 = vrot.lane.b32.xlu0 %v105, 127
    %v130 = vpop.permute.xlu0 %129
    %131 = vrot.lane.b32.xlu0 %v108, 127
    %v132 = vpop.permute.xlu0 %131
    %133 = vrot.lane.b32.xlu0 %v110, 127
    %v134 = vpop.permute.xlu0 %133
    %143 = vrot.lane.b32.xlu0 %v93, 126
    %v144 = vpop.permute.xlu0 %143
    %145 = vrot.lane.b32.xlu0 %v95, 126
    %v146 = vpop.permute.xlu0 %145
    %147 = vrot.lane.b32.xlu0 %v98, 126
    %v148 = vpop.permute.xlu0 %147
    %149 = vrot.lane.b32.xlu0 %v100, 126
    %v150 = vpop.permute.xlu0 %149
    %151 = vrot.lane.b32.xlu0 %v103, 126
    %v152 = vpop.permute.xlu0 %151
    %153 = vrot.lane.b32.xlu0 %v105, 126
    %v154 = vpop.permute.xlu0 %153
    %155 = vrot.lane.b32.xlu0 %v108, 126
    %v156 = vpop.permute.xlu0 %155
    %157 = vrot.lane.b32.xlu0 %v110, 126
    %v158 = vpop.permute.xlu0 %157
    %vm167 = vcmask 1045504
    %v168 = vrot.slane %v18, 2
    %v169 = vrot.slane %v19, 2
    %v170 = vsel %vm167, %v168, %v169
    %v171 = vrot.slane %v20, 2
    %v172 = vsel %vm167, %v169, %v171
    %v173 = vrot.slane %v21, 2
    %v174 = vrot.slane %v22, 2
    %v175 = vsel %vm167, %v173, %v174
    %v176 = vrot.slane %v23, 2
    %v177 = vsel %vm167, %v174, %v176
    %v178 = vrot.slane %v24, 2
    %v179 = vrot.slane %v25, 2
    %v180 = vsel %vm167, %v178, %v179
    %v181 = vrot.slane %v26, 2
    %v182 = vsel %vm167, %v179, %v181
    %v183 = vrot.slane %v27, 2
    %v184 = vrot.slane %v28, 2
    %v185 = vsel %vm167, %v183, %v184
    %v186 = vrot.slane %v29, 2
    %v187 = vsel %vm167, %v184, %v186
    %196 = vrot.lane.b32.xlu0 %v170, 127
    %v197 = vpop.permute.xlu0 %196
    %198 = vrot.lane.b32.xlu0 %v172, 127
    %v199 = vpop.permute.xlu0 %198
    %200 = vrot.lane.b32.xlu0 %v175, 127
    %v201 = vpop.permute.xlu0 %200
    %202 = vrot.lane.b32.xlu0 %v177, 127
    %v203 = vpop.permute.xlu0 %202
    %204 = vrot.lane.b32.xlu0 %v180, 127
    %v205 = vpop.permute.xlu0 %204
    %206 = vrot.lane.b32.xlu0 %v182, 127
    %v207 = vpop.permute.xlu0 %206
    %208 = vrot.lane.b32.xlu0 %v185, 127
    %v209 = vpop.permute.xlu0 %208
    %210 = vrot.lane.b32.xlu0 %v187, 127
    %v211 = vpop.permute.xlu0 %210
    %220 = vrot.lane.b32.xlu0 %v170, 126
    %v221 = vpop.permute.xlu0 %220
    %222 = vrot.lane.b32.xlu0 %v172, 126
    %v223 = vpop.permute.xlu0 %222
    %224 = vrot.lane.b32.xlu0 %v175, 126
    %v225 = vpop.permute.xlu0 %224
    %226 = vrot.lane.b32.xlu0 %v177, 126
    %v227 = vpop.permute.xlu0 %226
    %228 = vrot.lane.b32.xlu0 %v180, 126
    %v229 = vpop.permute.xlu0 %228
    %230 = vrot.lane.b32.xlu0 %v182, 126
    %v231 = vpop.permute.xlu0 %230
    %232 = vrot.lane.b32.xlu0 %v185, 126
    %v233 = vpop.permute.xlu0 %232
    %234 = vrot.lane.b32.xlu0 %v187, 126
    %v235 = vpop.permute.xlu0 %234
    %v244 = vcombine.low %v18, %v24
    %v245 = vcombine.high %v18, %v24
    %v247 = vunpack.c.l.s4 1983009808
    %v248 = vunpack.c.0.s8 %v247
    %v249 = vlaneseq
    %v250 = vshrl.u32 %v249, 7
    %v251 = vsub.s32 %v248, %v250
    %v252 = vrot.slane %v244, %v251
    %v254 = vunpack.c.l.s4 1983009808
    %v255 = vunpack.c.0.s8 %v254
    %v256 = vlaneseq
    %v257 = vshrl.u32 %v256, 7
    %v258 = vsub.s32 %v255, %v257
    %v259 = vrot.slane %v245, %v258
    %v260 = vcombine.low %v21, %v27
    %v261 = vcombine.high %v21, %v27
    %v263 = vunpack.c.l.s4 1983009808
    %v264 = vunpack.c.0.s8 %v263
    %v265 = vlaneseq
    %v266 = vshrl.u32 %v265, 7
    %v267 = vsub.s32 %v264, %v266
    %v268 = vrot.slane %v260, %v267
    %v270 = vunpack.c.l.s4 1983009808
    %v271 = vunpack.c.0.s8 %v270
    %v272 = vlaneseq
    %v273 = vshrl.u32 %v272, 7
    %v274 = vsub.s32 %v271, %v273
    %v275 = vrot.slane %v261, %v274
    %v276 = vcombine.low %v39, %v47
    %v277 = vcombine.high %v39, %v47
    %v279 = vunpack.c.l.s4 1983009808
    %v280 = vunpack.c.0.s8 %v279
    %v281 = vlaneseq
    %v282 = vshrl.u32 %v281, 7
    %v283 = vsub.s32 %v280, %v282
    %v284 = vrot.slane %v276, %v283
    %v286 = vunpack.c.l.s4 1983009808
    %v287 = vunpack.c.0.s8 %v286
    %v288 = vlaneseq
    %v289 = vshrl.u32 %v288, 7
    %v290 = vsub.s32 %v287, %v289
    %v291 = vrot.slane %v277, %v290
    %v292 = vcombine.low %v43, %v51
    %v293 = vcombine.high %v43, %v51
    %v295 = vunpack.c.l.s4 1983009808
    %v296 = vunpack.c.0.s8 %v295
    %v297 = vlaneseq
    %v298 = vshrl.u32 %v297, 7
    %v299 = vsub.s32 %v296, %v298
    %v300 = vrot.slane %v292, %v299
    %v302 = vunpack.c.l.s4 1983009808
    %v303 = vunpack.c.0.s8 %v302
    %v304 = vlaneseq
    %v305 = vshrl.u32 %v304, 7
    %v306 = vsub.s32 %v303, %v305
    %v307 = vrot.slane %v293, %v306
    %v308 = vcombine.low %v252, %v268
    %v309 = vcombine.high %v252, %v268
    %v311 = vunpack.c.l.s4 1934713408
    %v312 = vunpack.c.0.s8 %v311
    %v313 = vlaneseq
    %v314 = vshrl.u32 %v313, 7
    %v315 = vsub.s32 %v312, %v314
    %v316 = vrot.slane %v308, %v315
    %v318 = vunpack.c.l.s4 1934713408
    %v319 = vunpack.c.0.s8 %v318
    %v320 = vlaneseq
    %v321 = vshrl.u32 %v320, 7
    %v322 = vsub.s32 %v319, %v321
    %v323 = vrot.slane %v309, %v322
    %v324 = vcombine.low %v259, %v275
    %v325 = vcombine.high %v259, %v275
    %v327 = vunpack.c.l.s4 1934713408
    %v328 = vunpack.c.0.s8 %v327
    %v329 = vlaneseq
    %v330 = vshrl.u32 %v329, 7
    %v331 = vsub.s32 %v328, %v330
    %v332 = vrot.slane %v324, %v331
    %v334 = vunpack.c.l.s4 1934713408
    %v335 = vunpack.c.0.s8 %v334
    %v336 = vlaneseq
    %v337 = vshrl.u32 %v336, 7
    %v338 = vsub.s32 %v335, %v337
    %v339 = vrot.slane %v325, %v338
    %v340 = vcombine.low %v284, %v300
    %v341 = vcombine.high %v284, %v300
    %v343 = vunpack.c.l.s4 1934713408
    %v344 = vunpack.c.0.s8 %v343
    %v345 = vlaneseq
    %v346 = vshrl.u32 %v345, 7
    %v347 = vsub.s32 %v344, %v346
    %v348 = vrot.slane %v340, %v347
    %v350 = vunpack.c.l.s4 1934713408
    %v351 = vunpack.c.0.s8 %v350
    %v352 = vlaneseq
    %v353 = vshrl.u32 %v352, 7
    %v354 = vsub.s32 %v351, %v353
    %v355 = vrot.slane %v341, %v354
    %v356 = vcombine.low %v291, %v307
    %v357 = vcombine.high %v291, %v307
    %v359 = vunpack.c.l.s4 1934713408
    %v360 = vunpack.c.0.s8 %v359
    %v361 = vlaneseq
    %v362 = vshrl.u32 %v361, 7
    %v363 = vsub.s32 %v360, %v362
    %v364 = vrot.slane %v356, %v363
    %v366 = vunpack.c.l.s4 1934713408
    %v367 = vunpack.c.0.s8 %v366
    %v368 = vlaneseq
    %v369 = vshrl.u32 %v368, 7
    %v370 = vsub.s32 %v367, %v369
    %v371 = vrot.slane %v357, %v370
    %v372 = vcombine.low %v316, %v348
    %v373 = vcombine.high %v316, %v348
    %v374 = vcombine.low %v323, %v355
    %v375 = vcombine.high %v323, %v355
    %v376 = vcombine.low %v332, %v364
    %v377 = vcombine.high %v332, %v364
    %v378 = vcombine.low %v339, %v371
    %v379 = vcombine.high %v339, %v371
    %v380 = vcombine.low %v63, %v71
    %v381 = vcombine.high %v63, %v71
    %v383 = vunpack.c.l.s4 1983009808
    %v384 = vunpack.c.0.s8 %v383
    %v385 = vlaneseq
    %v386 = vshrl.u32 %v385, 7
    %v387 = vsub.s32 %v384, %v386
    %v388 = vrot.slane %v380, %v387
    %v390 = vunpack.c.l.s4 1983009808
    %v391 = vunpack.c.0.s8 %v390
    %v392 = vlaneseq
    %v393 = vshrl.u32 %v392, 7
    %v394 = vsub.s32 %v391, %v393
    %v395 = vrot.slane %v381, %v394
    %v396 = vcombine.low %v67, %v75
    %v397 = vcombine.high %v67, %v75
    %v399 = vunpack.c.l.s4 1983009808
    %v400 = vunpack.c.0.s8 %v399
    %v401 = vlaneseq
    %v402 = vshrl.u32 %v401, 7
    %v403 = vsub.s32 %v400, %v402
    %v404 = vrot.slane %v396, %v403
    %v406 = vunpack.c.l.s4 1983009808
    %v407 = vunpack.c.0.s8 %v406
    %v408 = vlaneseq
    %v409 = vshrl.u32 %v408, 7
    %v410 = vsub.s32 %v407, %v409
    %v411 = vrot.slane %v397, %v410
    %v412 = vcombine.low %v93, %v103
    %v413 = vcombine.high %v93, %v103
    %v415 = vunpack.c.l.s4 1983009808
    %v416 = vunpack.c.0.s8 %v415
    %v417 = vlaneseq
    %v418 = vshrl.u32 %v417, 7
    %v419 = vsub.s32 %v416, %v418
    %v420 = vrot.slane %v412, %v419
    %v422 = vunpack.c.l.s4 1983009808
    %v423 = vunpack.c.0.s8 %v422
    %v424 = vlaneseq
    %v425 = vshrl.u32 %v424, 7
    %v426 = vsub.s32 %v423, %v425
    %v427 = vrot.slane %v413, %v426
    %v428 = vcombine.low %v98, %v108
    %v429 = vcombine.high %v98, %v108
    %v431 = vunpack.c.l.s4 1983009808
    %v432 = vunpack.c.0.s8 %v431
    %v433 = vlaneseq
    %v434 = vshrl.u32 %v433, 7
    %v435 = vsub.s32 %v432, %v434
    %v436 = vrot.slane %v428, %v435
    %v438 = vunpack.c.l.s4 1983009808
    %v439 = vunpack.c.0.s8 %v438
    %v440 = vlaneseq
    %v441 = vshrl.u32 %v440, 7
    %v442 = vsub.s32 %v439, %v441
    %v443 = vrot.slane %v429, %v442
    %v444 = vcombine.low %v388, %v404
    %v445 = vcombine.high %v388, %v404
    %v447 = vunpack.c.l.s4 1934713408
    %v448 = vunpack.c.0.s8 %v447
    %v449 = vlaneseq
    %v450 = vshrl.u32 %v449, 7
    %v451 = vsub.s32 %v448, %v450
    %v452 = vrot.slane %v444, %v451
    %v454 = vunpack.c.l.s4 1934713408
    %v455 = vunpack.c.0.s8 %v454
    %v456 = vlaneseq
    %v457 = vshrl.u32 %v456, 7
    %v458 = vsub.s32 %v455, %v457
    %v459 = vrot.slane %v445, %v458
    %v460 = vcombine.low %v395, %v411
    %v461 = vcombine.high %v395, %v411
    %v463 = vunpack.c.l.s4 1934713408
    %v464 = vunpack.c.0.s8 %v463
    %v465 = vlaneseq
    %v466 = vshrl.u32 %v465, 7
    %v467 = vsub.s32 %v464, %v466
    %v468 = vrot.slane %v460, %v467
    %v470 = vunpack.c.l.s4 1934713408
    %v471 = vunpack.c.0.s8 %v470
    %v472 = vlaneseq
    %v473 = vshrl.u32 %v472, 7
    %v474 = vsub.s32 %v471, %v473
    %v475 = vrot.slane %v461, %v474
    %v476 = vcombine.low %v420, %v436
    %v477 = vcombine.high %v420, %v436
    %v479 = vunpack.c.l.s4 1934713408
    %v480 = vunpack.c.0.s8 %v479
    %v481 = vlaneseq
    %v482 = vshrl.u32 %v481, 7
    %v483 = vsub.s32 %v480, %v482
    %v484 = vrot.slane %v476, %v483
    %v486 = vunpack.c.l.s4 1934713408
    %v487 = vunpack.c.0.s8 %v486
    %v488 = vlaneseq
    %v489 = vshrl.u32 %v488, 7
    %v490 = vsub.s32 %v487, %v489
    %v491 = vrot.slane %v477, %v490
    %v492 = vcombine.low %v427, %v443
    %v493 = vcombine.high %v427, %v443
    %v495 = vunpack.c.l.s4 1934713408
    %v496 = vunpack.c.0.s8 %v495
    %v497 = vlaneseq
    %v498 = vshrl.u32 %v497, 7
    %v499 = vsub.s32 %v496, %v498
    %v500 = vrot.slane %v492, %v499
    %v502 = vunpack.c.l.s4 1934713408
    %v503 = vunpack.c.0.s8 %v502
    %v504 = vlaneseq
    %v505 = vshrl.u32 %v504, 7
    %v506 = vsub.s32 %v503, %v505
    %v507 = vrot.slane %v493, %v506
    %v508 = vcombine.low %v452, %v484
    %v509 = vcombine.high %v452, %v484
    %v510 = vcombine.low %v459, %v491
    %v511 = vcombine.high %v459, %v491
    %v512 = vcombine.low %v468, %v500
    %v513 = vcombine.high %v468, %v500
    %v514 = vcombine.low %v475, %v507
    %v515 = vcombine.high %v475, %v507
    %v516 = vcombine.low %v120, %v128
    %v517 = vcombine.high %v120, %v128
    %v519 = vunpack.c.l.s4 1983009808
    %v520 = vunpack.c.0.s8 %v519
    %v521 = vlaneseq
    %v522 = vshrl.u32 %v521, 7
    %v523 = vsub.s32 %v520, %v522
    %v524 = vrot.slane %v516, %v523
    %v526 = vunpack.c.l.s4 1983009808
    %v527 = vunpack.c.0.s8 %v526
    %v528 = vlaneseq
    %v529 = vshrl.u32 %v528, 7
    %v530 = vsub.s32 %v527, %v529
    %v531 = vrot.slane %v517, %v530
    %v532 = vcombine.low %v124, %v132
    %v533 = vcombine.high %v124, %v132
    %v535 = vunpack.c.l.s4 1983009808
    %v536 = vunpack.c.0.s8 %v535
    %v537 = vlaneseq
    %v538 = vshrl.u32 %v537, 7
    %v539 = vsub.s32 %v536, %v538
    %v540 = vrot.slane %v532, %v539
    %v542 = vunpack.c.l.s4 1983009808
    %v543 = vunpack.c.0.s8 %v542
    %v544 = vlaneseq
    %v545 = vshrl.u32 %v544, 7
    %v546 = vsub.s32 %v543, %v545
    %v547 = vrot.slane %v533, %v546
    %v548 = vcombine.low %v144, %v152
    %v549 = vcombine.high %v144, %v152
    %v551 = vunpack.c.l.s4 1983009808
    %v552 = vunpack.c.0.s8 %v551
    %v553 = vlaneseq
    %v554 = vshrl.u32 %v553, 7
    %v555 = vsub.s32 %v552, %v554
    %v556 = vrot.slane %v548, %v555
    %v558 = vunpack.c.l.s4 1983009808
    %v559 = vunpack.c.0.s8 %v558
    %v560 = vlaneseq
    %v561 = vshrl.u32 %v560, 7
    %v562 = vsub.s32 %v559, %v561
    %v563 = vrot.slane %v549, %v562
    %v564 = vcombine.low %v148, %v156
    %v565 = vcombine.high %v148, %v156
    %v567 = vunpack.c.l.s4 1983009808
    %v568 = vunpack.c.0.s8 %v567
    %v569 = vlaneseq
    %v570 = vshrl.u32 %v569, 7
    %v571 = vsub.s32 %v568, %v570
    %v572 = vrot.slane %v564, %v571
    %v574 = vunpack.c.l.s4 1983009808
    %v575 = vunpack.c.0.s8 %v574
    %v576 = vlaneseq
    %v577 = vshrl.u32 %v576, 7
    %v578 = vsub.s32 %v575, %v577
    %v579 = vrot.slane %v565, %v578
    %v580 = vcombine.low %v524, %v540
    %v581 = vcombine.high %v524, %v540
    %v583 = vunpack.c.l.s4 1934713408
    %v584 = vunpack.c.0.s8 %v583
    %v585 = vlaneseq
    %v586 = vshrl.u32 %v585, 7
    %v587 = vsub.s32 %v584, %v586
    %v588 = vrot.slane %v580, %v587
    %v590 = vunpack.c.l.s4 1934713408
    %v591 = vunpack.c.0.s8 %v590
    %v592 = vlaneseq
    %v593 = vshrl.u32 %v592, 7
    %v594 = vsub.s32 %v591, %v593
    %v595 = vrot.slane %v581, %v594
    %v596 = vcombine.low %v531, %v547
    %v597 = vcombine.high %v531, %v547
    %v599 = vunpack.c.l.s4 1934713408
    %v600 = vunpack.c.0.s8 %v599
    %v601 = vlaneseq
    %v602 = vshrl.u32 %v601, 7
    %v603 = vsub.s32 %v600, %v602
    %v604 = vrot.slane %v596, %v603
    %v606 = vunpack.c.l.s4 1934713408
    %v607 = vunpack.c.0.s8 %v606
    %v608 = vlaneseq
    %v609 = vshrl.u32 %v608, 7
    %v610 = vsub.s32 %v607, %v609
    %v611 = vrot.slane %v597, %v610
    %v612 = vcombine.low %v556, %v572
    %v613 = vcombine.high %v556, %v572
    %v615 = vunpack.c.l.s4 1934713408
    %v616 = vunpack.c.0.s8 %v615
    %v617 = vlaneseq
    %v618 = vshrl.u32 %v617, 7
    %v619 = vsub.s32 %v616, %v618
    %v620 = vrot.slane %v612, %v619
    %v622 = vunpack.c.l.s4 1934713408
    %v623 = vunpack.c.0.s8 %v622
    %v624 = vlaneseq
    %v625 = vshrl.u32 %v624, 7
    %v626 = vsub.s32 %v623, %v625
    %v627 = vrot.slane %v613, %v626
    %v628 = vcombine.low %v563, %v579
    %v629 = vcombine.high %v563, %v579
    %v631 = vunpack.c.l.s4 1934713408
    %v632 = vunpack.c.0.s8 %v631
    %v633 = vlaneseq
    %v634 = vshrl.u32 %v633, 7
    %v635 = vsub.s32 %v632, %v634
    %v636 = vrot.slane %v628, %v635
    %v638 = vunpack.c.l.s4 1934713408
    %v639 = vunpack.c.0.s8 %v638
    %v640 = vlaneseq
    %v641 = vshrl.u32 %v640, 7
    %v642 = vsub.s32 %v639, %v641
    %v643 = vrot.slane %v629, %v642
    %v644 = vcombine.low %v588, %v620
    %v645 = vcombine.high %v588, %v620
    %v646 = vcombine.low %v595, %v627
    %v647 = vcombine.high %v595, %v627
    %v648 = vcombine.low %v604, %v636
    %v649 = vcombine.high %v604, %v636
    %v650 = vcombine.low %v611, %v643
    %v651 = vcombine.high %v611, %v643
    %v652 = vcombine.low %v170, %v180
    %v653 = vcombine.high %v170, %v180
    %v655 = vunpack.c.l.s4 1983009808
    %v656 = vunpack.c.0.s8 %v655
    %v657 = vlaneseq
    %v658 = vshrl.u32 %v657, 7
    %v659 = vsub.s32 %v656, %v658
    %v660 = vrot.slane %v652, %v659
    %v662 = vunpack.c.l.s4 1983009808
    %v663 = vunpack.c.0.s8 %v662
    %v664 = vlaneseq
    %v665 = vshrl.u32 %v664, 7
    %v666 = vsub.s32 %v663, %v665
    %v667 = vrot.slane %v653, %v666
    %v668 = vcombine.low %v175, %v185
    %v669 = vcombine.high %v175, %v185
    %v671 = vunpack.c.l.s4 1983009808
    %v672 = vunpack.c.0.s8 %v671
    %v673 = vlaneseq
    %v674 = vshrl.u32 %v673, 7
    %v675 = vsub.s32 %v672, %v674
    %v676 = vrot.slane %v668, %v675
    %v678 = vunpack.c.l.s4 1983009808
    %v679 = vunpack.c.0.s8 %v678
    %v680 = vlaneseq
    %v681 = vshrl.u32 %v680, 7
    %v682 = vsub.s32 %v679, %v681
    %v683 = vrot.slane %v669, %v682
    %v684 = vcombine.low %v197, %v205
    %v685 = vcombine.high %v197, %v205
    %v687 = vunpack.c.l.s4 1983009808
    %v688 = vunpack.c.0.s8 %v687
    %v689 = vlaneseq
    %v690 = vshrl.u32 %v689, 7
    %v691 = vsub.s32 %v688, %v690
    %v692 = vrot.slane %v684, %v691
    %v694 = vunpack.c.l.s4 1983009808
    %v695 = vunpack.c.0.s8 %v694
    %v696 = vlaneseq
    %v697 = vshrl.u32 %v696, 7
    %v698 = vsub.s32 %v695, %v697
    %v699 = vrot.slane %v685, %v698
    %v700 = vcombine.low %v201, %v209
    %v701 = vcombine.high %v201, %v209
    %v703 = vunpack.c.l.s4 1983009808
    %v704 = vunpack.c.0.s8 %v703
    %v705 = vlaneseq
    %v706 = vshrl.u32 %v705, 7
    %v707 = vsub.s32 %v704, %v706
    %v708 = vrot.slane %v700, %v707
    %v710 = vunpack.c.l.s4 1983009808
    %v711 = vunpack.c.0.s8 %v710
    %v712 = vlaneseq
    %v713 = vshrl.u32 %v712, 7
    %v714 = vsub.s32 %v711, %v713
    %v715 = vrot.slane %v701, %v714
    %v716 = vcombine.low %v660, %v676
    %v717 = vcombine.high %v660, %v676
    %v719 = vunpack.c.l.s4 1934713408
    %v720 = vunpack.c.0.s8 %v719
    %v721 = vlaneseq
    %v722 = vshrl.u32 %v721, 7
    %v723 = vsub.s32 %v720, %v722
    %v724 = vrot.slane %v716, %v723
    %v726 = vunpack.c.l.s4 1934713408
    %v727 = vunpack.c.0.s8 %v726
    %v728 = vlaneseq
    %v729 = vshrl.u32 %v728, 7
    %v730 = vsub.s32 %v727, %v729
    %v731 = vrot.slane %v717, %v730
    %v732 = vcombine.low %v667, %v683
    %v733 = vcombine.high %v667, %v683
    %v735 = vunpack.c.l.s4 1934713408
    %v736 = vunpack.c.0.s8 %v735
    %v737 = vlaneseq
    %v738 = vshrl.u32 %v737, 7
    %v739 = vsub.s32 %v736, %v738
    %v740 = vrot.slane %v732, %v739
    %v742 = vunpack.c.l.s4 1934713408
    %v743 = vunpack.c.0.s8 %v742
    %v744 = vlaneseq
    %v745 = vshrl.u32 %v744, 7
    %v746 = vsub.s32 %v743, %v745
    %v747 = vrot.slane %v733, %v746
    %v748 = vcombine.low %v692, %v708
    %v749 = vcombine.high %v692, %v708
    %v751 = vunpack.c.l.s4 1934713408
    %v752 = vunpack.c.0.s8 %v751
    %v753 = vlaneseq
    %v754 = vshrl.u32 %v753, 7
    %v755 = vsub.s32 %v752, %v754
    %v756 = vrot.slane %v748, %v755
    %v758 = vunpack.c.l.s4 1934713408
    %v759 = vunpack.c.0.s8 %v758
    %v760 = vlaneseq
    %v761 = vshrl.u32 %v760, 7
    %v762 = vsub.s32 %v759, %v761
    %v763 = vrot.slane %v749, %v762
    %v764 = vcombine.low %v699, %v715
    %v765 = vcombine.high %v699, %v715
    %v767 = vunpack.c.l.s4 1934713408
    %v768 = vunpack.c.0.s8 %v767
    %v769 = vlaneseq
    %v770 = vshrl.u32 %v769, 7
    %v771 = vsub.s32 %v768, %v770
    %v772 = vrot.slane %v764, %v771
    %v774 = vunpack.c.l.s4 1934713408
    %v775 = vunpack.c.0.s8 %v774
    %v776 = vlaneseq
    %v777 = vshrl.u32 %v776, 7
    %v778 = vsub.s32 %v775, %v777
    %v779 = vrot.slane %v765, %v778
    %v780 = vcombine.low %v724, %v756
    %v781 = vcombine.high %v724, %v756
    %v782 = vcombine.low %v731, %v763
    %v783 = vcombine.high %v731, %v763
    %v784 = vcombine.low %v740, %v772
    %v785 = vcombine.high %v740, %v772
    %v786 = vcombine.low %v747, %v779
    %v787 = vcombine.high %v747, %v779
    %v788 = vcombine.low %v221, %v229
    %v789 = vcombine.high %v221, %v229
    %v791 = vunpack.c.l.s4 1983009808
    %v792 = vunpack.c.0.s8 %v791
    %v793 = vlaneseq
    %v794 = vshrl.u32 %v793, 7
    %v795 = vsub.s32 %v792, %v794
    %v796 = vrot.slane %v788, %v795
    %v798 = vunpack.c.l.s4 1983009808
    %v799 = vunpack.c.0.s8 %v798
    %v800 = vlaneseq
    %v801 = vshrl.u32 %v800, 7
    %v802 = vsub.s32 %v799, %v801
    %v803 = vrot.slane %v789, %v802
    %v804 = vcombine.low %v225, %v233
    %v805 = vcombine.high %v225, %v233
    %v807 = vunpack.c.l.s4 1983009808
    %v808 = vunpack.c.0.s8 %v807
    %v809 = vlaneseq
    %v810 = vshrl.u32 %v809, 7
    %v811 = vsub.s32 %v808, %v810
    %v812 = vrot.slane %v804, %v811
    %v814 = vunpack.c.l.s4 1983009808
    %v815 = vunpack.c.0.s8 %v814
    %v816 = vlaneseq
    %v817 = vshrl.u32 %v816, 7
    %v818 = vsub.s32 %v815, %v817
    %v819 = vrot.slane %v805, %v818
    %v820 = vcombine.low %v796, %v812
    %v821 = vcombine.high %v796, %v812
    %v823 = vunpack.c.l.s4 1934713408
    %v824 = vunpack.c.0.s8 %v823
    %v825 = vlaneseq
    %v826 = vshrl.u32 %v825, 7
    %v827 = vsub.s32 %v824, %v826
    %v828 = vrot.slane %v820, %v827
    %v830 = vunpack.c.l.s4 1934713408
    %v831 = vunpack.c.0.s8 %v830
    %v832 = vlaneseq
    %v833 = vshrl.u32 %v832, 7
    %v834 = vsub.s32 %v831, %v833
    %v835 = vrot.slane %v821, %v834
    %v836 = vcombine.low %v803, %v819
    %v837 = vcombine.high %v803, %v819
    %v839 = vunpack.c.l.s4 1934713408
    %v840 = vunpack.c.0.s8 %v839
    %v841 = vlaneseq
    %v842 = vshrl.u32 %v841, 7
    %v843 = vsub.s32 %v840, %v842
    %v844 = vrot.slane %v836, %v843
    %v846 = vunpack.c.l.s4 1934713408
    %v847 = vunpack.c.0.s8 %v846
    %v848 = vlaneseq
    %v849 = vshrl.u32 %v848, 7
    %v850 = vsub.s32 %v847, %v849
    %v851 = vrot.slane %v837, %v850
    %v852 = vcombine.high %v828, 0.0
    %v853 = vcombine.high %v835, 0.0
    %v854 = vcombine.high %v844, 0.0
    %v855 = vcombine.high %v851, 0.0
    %v856 = vcombine.low %v19, %v25
    %v857 = vcombine.high %v19, %v25
    %v859 = vunpack.c.l.s4 1983009808
    %v860 = vunpack.c.0.s8 %v859
    %v861 = vlaneseq
    %v862 = vshrl.u32 %v861, 7
    %v863 = vsub.s32 %v860, %v862
    %v864 = vrot.slane %v856, %v863
    %v866 = vunpack.c.l.s4 1983009808
    %v867 = vunpack.c.0.s8 %v866
    %v868 = vlaneseq
    %v869 = vshrl.u32 %v868, 7
    %v870 = vsub.s32 %v867, %v869
    %v871 = vrot.slane %v857, %v870
    %v872 = vcombine.low %v22, %v28
    %v873 = vcombine.high %v22, %v28
    %v875 = vunpack.c.l.s4 1983009808
    %v876 = vunpack.c.0.s8 %v875
    %v877 = vlaneseq
    %v878 = vshrl.u32 %v877, 7
    %v879 = vsub.s32 %v876, %v878
    %v880 = vrot.slane %v872, %v879
    %v882 = vunpack.c.l.s4 1983009808
    %v883 = vunpack.c.0.s8 %v882
    %v884 = vlaneseq
    %v885 = vshrl.u32 %v884, 7
    %v886 = vsub.s32 %v883, %v885
    %v887 = vrot.slane %v873, %v886
    %v888 = vcombine.low %v41, %v49
    %v889 = vcombine.high %v41, %v49
    %v891 = vunpack.c.l.s4 1983009808
    %v892 = vunpack.c.0.s8 %v891
    %v893 = vlaneseq
    %v894 = vshrl.u32 %v893, 7
    %v895 = vsub.s32 %v892, %v894
    %v896 = vrot.slane %v888, %v895
    %v898 = vunpack.c.l.s4 1983009808
    %v899 = vunpack.c.0.s8 %v898
    %v900 = vlaneseq
    %v901 = vshrl.u32 %v900, 7
    %v902 = vsub.s32 %v899, %v901
    %v903 = vrot.slane %v889, %v902
    %v904 = vcombine.low %v45, %v53
    %v905 = vcombine.high %v45, %v53
    %v907 = vunpack.c.l.s4 1983009808
    %v908 = vunpack.c.0.s8 %v907
    %v909 = vlaneseq
    %v910 = vshrl.u32 %v909, 7
    %v911 = vsub.s32 %v908, %v910
    %v912 = vrot.slane %v904, %v911
    %v914 = vunpack.c.l.s4 1983009808
    %v915 = vunpack.c.0.s8 %v914
    %v916 = vlaneseq
    %v917 = vshrl.u32 %v916, 7
    %v918 = vsub.s32 %v915, %v917
    %v919 = vrot.slane %v905, %v918
    %v920 = vcombine.low %v864, %v880
    %v921 = vcombine.high %v864, %v880
    %v923 = vunpack.c.l.s4 1934713408
    %v924 = vunpack.c.0.s8 %v923
    %v925 = vlaneseq
    %v926 = vshrl.u32 %v925, 7
    %v927 = vsub.s32 %v924, %v926
    %v928 = vrot.slane %v920, %v927
    %v930 = vunpack.c.l.s4 1934713408
    %v931 = vunpack.c.0.s8 %v930
    %v932 = vlaneseq
    %v933 = vshrl.u32 %v932, 7
    %v934 = vsub.s32 %v931, %v933
    %v935 = vrot.slane %v921, %v934
    %v936 = vcombine.low %v871, %v887
    %v937 = vcombine.high %v871, %v887
    %v939 = vunpack.c.l.s4 1934713408
    %v940 = vunpack.c.0.s8 %v939
    %v941 = vlaneseq
    %v942 = vshrl.u32 %v941, 7
    %v943 = vsub.s32 %v940, %v942
    %v944 = vrot.slane %v936, %v943
    %v946 = vunpack.c.l.s4 1934713408
    %v947 = vunpack.c.0.s8 %v946
    %v948 = vlaneseq
    %v949 = vshrl.u32 %v948, 7
    %v950 = vsub.s32 %v947, %v949
    %v951 = vrot.slane %v937, %v950
    %v952 = vcombine.low %v896, %v912
    %v953 = vcombine.high %v896, %v912
    %v955 = vunpack.c.l.s4 1934713408
    %v956 = vunpack.c.0.s8 %v955
    %v957 = vlaneseq
    %v958 = vshrl.u32 %v957, 7
    %v959 = vsub.s32 %v956, %v958
    %v960 = vrot.slane %v952, %v959
    %v962 = vunpack.c.l.s4 1934713408
    %v963 = vunpack.c.0.s8 %v962
    %v964 = vlaneseq
    %v965 = vshrl.u32 %v964, 7
    %v966 = vsub.s32 %v963, %v965
    %v967 = vrot.slane %v953, %v966
    %v968 = vcombine.low %v903, %v919
    %v969 = vcombine.high %v903, %v919
    %v971 = vunpack.c.l.s4 1934713408
    %v972 = vunpack.c.0.s8 %v971
    %v973 = vlaneseq
    %v974 = vshrl.u32 %v973, 7
    %v975 = vsub.s32 %v972, %v974
    %v976 = vrot.slane %v968, %v975
    %v978 = vunpack.c.l.s4 1934713408
    %v979 = vunpack.c.0.s8 %v978
    %v980 = vlaneseq
    %v981 = vshrl.u32 %v980, 7
    %v982 = vsub.s32 %v979, %v981
    %v983 = vrot.slane %v969, %v982
    %v984 = vcombine.low %v928, %v960
    %v985 = vcombine.high %v928, %v960
    %v986 = vcombine.low %v935, %v967
    %v987 = vcombine.high %v935, %v967
    %v988 = vcombine.low %v944, %v976
    %v989 = vcombine.high %v944, %v976
    %v990 = vcombine.low %v951, %v983
    %v991 = vcombine.high %v951, %v983
    %v992 = vcombine.low %v65, %v73
    %v993 = vcombine.high %v65, %v73
    %v995 = vunpack.c.l.s4 1983009808
    %v996 = vunpack.c.0.s8 %v995
    %v997 = vlaneseq
    %v998 = vshrl.u32 %v997, 7
    %v999 = vsub.s32 %v996, %v998
    %v1000 = vrot.slane %v992, %v999
    %v1002 = vunpack.c.l.s4 1983009808
    %v1003 = vunpack.c.0.s8 %v1002
    %v1004 = vlaneseq
    %v1005 = vshrl.u32 %v1004, 7
    %v1006 = vsub.s32 %v1003, %v1005
    %v1007 = vrot.slane %v993, %v1006
    %v1008 = vcombine.low %v69, %v77
    %v1009 = vcombine.high %v69, %v77
    %v1011 = vunpack.c.l.s4 1983009808
    %v1012 = vunpack.c.0.s8 %v1011
    %v1013 = vlaneseq
    %v1014 = vshrl.u32 %v1013, 7
    %v1015 = vsub.s32 %v1012, %v1014
    %v1016 = vrot.slane %v1008, %v1015
    %v1018 = vunpack.c.l.s4 1983009808
    %v1019 = vunpack.c.0.s8 %v1018
    %v1020 = vlaneseq
    %v1021 = vshrl.u32 %v1020, 7
    %v1022 = vsub.s32 %v1019, %v1021
    %v1023 = vrot.slane %v1009, %v1022
    %v1024 = vcombine.low %v95, %v105
    %v1025 = vcombine.high %v95, %v105
    %v1027 = vunpack.c.l.s4 1983009808
    %v1028 = vunpack.c.0.s8 %v1027
    %v1029 = vlaneseq
    %v1030 = vshrl.u32 %v1029, 7
    %v1031 = vsub.s32 %v1028, %v1030
    %v1032 = vrot.slane %v1024, %v1031
    %v1034 = vunpack.c.l.s4 1983009808
    %v1035 = vunpack.c.0.s8 %v1034
    %v1036 = vlaneseq
    %v1037 = vshrl.u32 %v1036, 7
    %v1038 = vsub.s32 %v1035, %v1037
    %v1039 = vrot.slane %v1025, %v1038
    %v1040 = vcombine.low %v100, %v110
    %v1041 = vcombine.high %v100, %v110
    %v1043 = vunpack.c.l.s4 1983009808
    %v1044 = vunpack.c.0.s8 %v1043
    %v1045 = vlaneseq
    %v1046 = vshrl.u32 %v1045, 7
    %v1047 = vsub.s32 %v1044, %v1046
    %v1048 = vrot.slane %v1040, %v1047
    %v1050 = vunpack.c.l.s4 1983009808
    %v1051 = vunpack.c.0.s8 %v1050
    %v1052 = vlaneseq
    %v1053 = vshrl.u32 %v1052, 7
    %v1054 = vsub.s32 %v1051, %v1053
    %v1055 = vrot.slane %v1041, %v1054
    %v1056 = vcombine.low %v1000, %v1016
    %v1057 = vcombine.high %v1000, %v1016
    %v1059 = vunpack.c.l.s4 1934713408
    %v1060 = vunpack.c.0.s8 %v1059
    %v1061 = vlaneseq
    %v1062 = vshrl.u32 %v1061, 7
    %v1063 = vsub.s32 %v1060, %v1062
    %v1064 = vrot.slane %v1056, %v1063
    %v1066 = vunpack.c.l.s4 1934713408
    %v1067 = vunpack.c.0.s8 %v1066
    %v1068 = vlaneseq
    %v1069 = vshrl.u32 %v1068, 7
    %v1070 = vsub.s32 %v1067, %v1069
    %v1071 = vrot.slane %v1057, %v1070
    %v1072 = vcombine.low %v1007, %v1023
    %v1073 = vcombine.high %v1007, %v1023
    %v1075 = vunpack.c.l.s4 1934713408
    %v1076 = vunpack.c.0.s8 %v1075
    %v1077 = vlaneseq
    %v1078 = vshrl.u32 %v1077, 7
    %v1079 = vsub.s32 %v1076, %v1078
    %v1080 = vrot.slane %v1072, %v1079
    %v1082 = vunpack.c.l.s4 1934713408
    %v1083 = vunpack.c.0.s8 %v1082
    %v1084 = vlaneseq
    %v1085 = vshrl.u32 %v1084, 7
    %v1086 = vsub.s32 %v1083, %v1085
    %v1087 = vrot.slane %v1073, %v1086
    %v1088 = vcombine.low %v1032, %v1048
    %v1089 = vcombine.high %v1032, %v1048
    %v1091 = vunpack.c.l.s4 1934713408
    %v1092 = vunpack.c.0.s8 %v1091
    %v1093 = vlaneseq
    %v1094 = vshrl.u32 %v1093, 7
    %v1095 = vsub.s32 %v1092, %v1094
    %v1096 = vrot.slane %v1088, %v1095
    %v1098 = vunpack.c.l.s4 1934713408
    %v1099 = vunpack.c.0.s8 %v1098
    %v1100 = vlaneseq
    %v1101 = vshrl.u32 %v1100, 7
    %v1102 = vsub.s32 %v1099, %v1101
    %v1103 = vrot.slane %v1089, %v1102
    %v1104 = vcombine.low %v1039, %v1055
    %v1105 = vcombine.high %v1039, %v1055
    %v1107 = vunpack.c.l.s4 1934713408
    %v1108 = vunpack.c.0.s8 %v1107
    %v1109 = vlaneseq
    %v1110 = vshrl.u32 %v1109, 7
    %v1111 = vsub.s32 %v1108, %v1110
    %v1112 = vrot.slane %v1104, %v1111
    %v1114 = vunpack.c.l.s4 1934713408
    %v1115 = vunpack.c.0.s8 %v1114
    %v1116 = vlaneseq
    %v1117 = vshrl.u32 %v1116, 7
    %v1118 = vsub.s32 %v1115, %v1117
    %v1119 = vrot.slane %v1105, %v1118
    %v1120 = vcombine.low %v1064, %v1096
    %v1121 = vcombine.high %v1064, %v1096
    %v1122 = vcombine.low %v1071, %v1103
    %v1123 = vcombine.high %v1071, %v1103
    %v1124 = vcombine.low %v1080, %v1112
    %v1125 = vcombine.high %v1080, %v1112
    %v1126 = vcombine.low %v1087, %v1119
    %v1127 = vcombine.high %v1087, %v1119
    %v1128 = vcombine.low %v122, %v130
    %v1129 = vcombine.high %v122, %v130
    %v1131 = vunpack.c.l.s4 1983009808
    %v1132 = vunpack.c.0.s8 %v1131
    %v1133 = vlaneseq
    %v1134 = vshrl.u32 %v1133, 7
    %v1135 = vsub.s32 %v1132, %v1134
    %v1136 = vrot.slane %v1128, %v1135
    %v1138 = vunpack.c.l.s4 1983009808
    %v1139 = vunpack.c.0.s8 %v1138
    %v1140 = vlaneseq
    %v1141 = vshrl.u32 %v1140, 7
    %v1142 = vsub.s32 %v1139, %v1141
    %v1143 = vrot.slane %v1129, %v1142
    %v1144 = vcombine.low %v126, %v134
    %v1145 = vcombine.high %v126, %v134
    %v1147 = vunpack.c.l.s4 1983009808
    %v1148 = vunpack.c.0.s8 %v1147
    %v1149 = vlaneseq
    %v1150 = vshrl.u32 %v1149, 7
    %v1151 = vsub.s32 %v1148, %v1150
    %v1152 = vrot.slane %v1144, %v1151
    %v1154 = vunpack.c.l.s4 1983009808
    %v1155 = vunpack.c.0.s8 %v1154
    %v1156 = vlaneseq
    %v1157 = vshrl.u32 %v1156, 7
    %v1158 = vsub.s32 %v1155, %v1157
    %v1159 = vrot.slane %v1145, %v1158
    %v1160 = vcombine.low %v146, %v154
    %v1161 = vcombine.high %v146, %v154
    %v1163 = vunpack.c.l.s4 1983009808
    %v1164 = vunpack.c.0.s8 %v1163
    %v1165 = vlaneseq
    %v1166 = vshrl.u32 %v1165, 7
    %v1167 = vsub.s32 %v1164, %v1166
    %v1168 = vrot.slane %v1160, %v1167
    %v1170 = vunpack.c.l.s4 1983009808
    %v1171 = vunpack.c.0.s8 %v1170
    %v1172 = vlaneseq
    %v1173 = vshrl.u32 %v1172, 7
    %v1174 = vsub.s32 %v1171, %v1173
    %v1175 = vrot.slane %v1161, %v1174
    %v1176 = vcombine.low %v150, %v158
    %v1177 = vcombine.high %v150, %v158
    %v1179 = vunpack.c.l.s4 1983009808
    %v1180 = vunpack.c.0.s8 %v1179
    %v1181 = vlaneseq
    %v1182 = vshrl.u32 %v1181, 7
    %v1183 = vsub.s32 %v1180, %v1182
    %v1184 = vrot.slane %v1176, %v1183
    %v1186 = vunpack.c.l.s4 1983009808
    %v1187 = vunpack.c.0.s8 %v1186
    %v1188 = vlaneseq
    %v1189 = vshrl.u32 %v1188, 7
    %v1190 = vsub.s32 %v1187, %v1189
    %v1191 = vrot.slane %v1177, %v1190
    %v1192 = vcombine.low %v1136, %v1152
    %v1193 = vcombine.high %v1136, %v1152
    %v1195 = vunpack.c.l.s4 1934713408
    %v1196 = vunpack.c.0.s8 %v1195
    %v1197 = vlaneseq
    %v1198 = vshrl.u32 %v1197, 7
    %v1199 = vsub.s32 %v1196, %v1198
    %v1200 = vrot.slane %v1192, %v1199
    %v1202 = vunpack.c.l.s4 1934713408
    %v1203 = vunpack.c.0.s8 %v1202
    %v1204 = vlaneseq
    %v1205 = vshrl.u32 %v1204, 7
    %v1206 = vsub.s32 %v1203, %v1205
    %v1207 = vrot.slane %v1193, %v1206
    %v1208 = vcombine.low %v1143, %v1159
    %v1209 = vcombine.high %v1143, %v1159
    %v1211 = vunpack.c.l.s4 1934713408
    %v1212 = vunpack.c.0.s8 %v1211
    %v1213 = vlaneseq
    %v1214 = vshrl.u32 %v1213, 7
    %v1215 = vsub.s32 %v1212, %v1214
    %v1216 = vrot.slane %v1208, %v1215
    %v1218 = vunpack.c.l.s4 1934713408
    %v1219 = vunpack.c.0.s8 %v1218
    %v1220 = vlaneseq
    %v1221 = vshrl.u32 %v1220, 7
    %v1222 = vsub.s32 %v1219, %v1221
    %v1223 = vrot.slane %v1209, %v1222
    %v1224 = vcombine.low %v1168, %v1184
    %v1225 = vcombine.high %v1168, %v1184
    %v1227 = vunpack.c.l.s4 1934713408
    %v1228 = vunpack.c.0.s8 %v1227
    %v1229 = vlaneseq
    %v1230 = vshrl.u32 %v1229, 7
    %v1231 = vsub.s32 %v1228, %v1230
    %v1232 = vrot.slane %v1224, %v1231
    %v1234 = vunpack.c.l.s4 1934713408
    %v1235 = vunpack.c.0.s8 %v1234
    %v1236 = vlaneseq
    %v1237 = vshrl.u32 %v1236, 7
    %v1238 = vsub.s32 %v1235, %v1237
    %v1239 = vrot.slane %v1225, %v1238
    %v1240 = vcombine.low %v1175, %v1191
    %v1241 = vcombine.high %v1175, %v1191
    %v1243 = vunpack.c.l.s4 1934713408
    %v1244 = vunpack.c.0.s8 %v1243
    %v1245 = vlaneseq
    %v1246 = vshrl.u32 %v1245, 7
    %v1247 = vsub.s32 %v1244, %v1246
    %v1248 = vrot.slane %v1240, %v1247
    %v1250 = vunpack.c.l.s4 1934713408
    %v1251 = vunpack.c.0.s8 %v1250
    %v1252 = vlaneseq
    %v1253 = vshrl.u32 %v1252, 7
    %v1254 = vsub.s32 %v1251, %v1253
    %v1255 = vrot.slane %v1241, %v1254
    %v1256 = vcombine.low %v1200, %v1232
    %v1257 = vcombine.high %v1200, %v1232
    %v1258 = vcombine.low %v1207, %v1239
    %v1259 = vcombine.high %v1207, %v1239
    %v1260 = vcombine.low %v1216, %v1248
    %v1261 = vcombine.high %v1216, %v1248
    %v1262 = vcombine.low %v1223, %v1255
    %v1263 = vcombine.high %v1223, %v1255
    %v1264 = vcombine.low %v172, %v182
    %v1265 = vcombine.high %v172, %v182
    %v1267 = vunpack.c.l.s4 1983009808
    %v1268 = vunpack.c.0.s8 %v1267
    %v1269 = vlaneseq
    %v1270 = vshrl.u32 %v1269, 7
    %v1271 = vsub.s32 %v1268, %v1270
    %v1272 = vrot.slane %v1264, %v1271
    %v1274 = vunpack.c.l.s4 1983009808
    %v1275 = vunpack.c.0.s8 %v1274
    %v1276 = vlaneseq
    %v1277 = vshrl.u32 %v1276, 7
    %v1278 = vsub.s32 %v1275, %v1277
    %v1279 = vrot.slane %v1265, %v1278
    %v1280 = vcombine.low %v177, %v187
    %v1281 = vcombine.high %v177, %v187
    %v1283 = vunpack.c.l.s4 1983009808
    %v1284 = vunpack.c.0.s8 %v1283
    %v1285 = vlaneseq
    %v1286 = vshrl.u32 %v1285, 7
    %v1287 = vsub.s32 %v1284, %v1286
    %v1288 = vrot.slane %v1280, %v1287
    %v1290 = vunpack.c.l.s4 1983009808
    %v1291 = vunpack.c.0.s8 %v1290
    %v1292 = vlaneseq
    %v1293 = vshrl.u32 %v1292, 7
    %v1294 = vsub.s32 %v1291, %v1293
    %v1295 = vrot.slane %v1281, %v1294
    %v1296 = vcombine.low %v199, %v207
    %v1297 = vcombine.high %v199, %v207
    %v1299 = vunpack.c.l.s4 1983009808
    %v1300 = vunpack.c.0.s8 %v1299
    %v1301 = vlaneseq
    %v1302 = vshrl.u32 %v1301, 7
    %v1303 = vsub.s32 %v1300, %v1302
    %v1304 = vrot.slane %v1296, %v1303
    %v1306 = vunpack.c.l.s4 1983009808
    %v1307 = vunpack.c.0.s8 %v1306
    %v1308 = vlaneseq
    %v1309 = vshrl.u32 %v1308, 7
    %v1310 = vsub.s32 %v1307, %v1309
    %v1311 = vrot.slane %v1297, %v1310
    %v1312 = vcombine.low %v203, %v211
    %v1313 = vcombine.high %v203, %v211
    %v1315 = vunpack.c.l.s4 1983009808
    %v1316 = vunpack.c.0.s8 %v1315
    %v1317 = vlaneseq
    %v1318 = vshrl.u32 %v1317, 7
    %v1319 = vsub.s32 %v1316, %v1318
    %v1320 = vrot.slane %v1312, %v1319
    %v1322 = vunpack.c.l.s4 1983009808
    %v1323 = vunpack.c.0.s8 %v1322
    %v1324 = vlaneseq
    %v1325 = vshrl.u32 %v1324, 7
    %v1326 = vsub.s32 %v1323, %v1325
    %v1327 = vrot.slane %v1313, %v1326
    %v1328 = vcombine.low %v1272, %v1288
    %v1329 = vcombine.high %v1272, %v1288
    %v1331 = vunpack.c.l.s4 1934713408
    %v1332 = vunpack.c.0.s8 %v1331
    %v1333 = vlaneseq
    %v1334 = vshrl.u32 %v1333, 7
    %v1335 = vsub.s32 %v1332, %v1334
    %v1336 = vrot.slane %v1328, %v1335
    %v1338 = vunpack.c.l.s4 1934713408
    %v1339 = vunpack.c.0.s8 %v1338
    %v1340 = vlaneseq
    %v1341 = vshrl.u32 %v1340, 7
    %v1342 = vsub.s32 %v1339, %v1341
    %v1343 = vrot.slane %v1329, %v1342
    %v1344 = vcombine.low %v1279, %v1295
    %v1345 = vcombine.high %v1279, %v1295
    %v1347 = vunpack.c.l.s4 1934713408
    %v1348 = vunpack.c.0.s8 %v1347
    %v1349 = vlaneseq
    %v1350 = vshrl.u32 %v1349, 7
    %v1351 = vsub.s32 %v1348, %v1350
    %v1352 = vrot.slane %v1344, %v1351
    %v1354 = vunpack.c.l.s4 1934713408
    %v1355 = vunpack.c.0.s8 %v1354
    %v1356 = vlaneseq
    %v1357 = vshrl.u32 %v1356, 7
    %v1358 = vsub.s32 %v1355, %v1357
    %v1359 = vrot.slane %v1345, %v1358
    %v1360 = vcombine.low %v1304, %v1320
    %v1361 = vcombine.high %v1304, %v1320
    %v1363 = vunpack.c.l.s4 1934713408
    %v1364 = vunpack.c.0.s8 %v1363
    %v1365 = vlaneseq
    %v1366 = vshrl.u32 %v1365, 7
    %v1367 = vsub.s32 %v1364, %v1366
    %v1368 = vrot.slane %v1360, %v1367
    %v1370 = vunpack.c.l.s4 1934713408
    %v1371 = vunpack.c.0.s8 %v1370
    %v1372 = vlaneseq
    %v1373 = vshrl.u32 %v1372, 7
    %v1374 = vsub.s32 %v1371, %v1373
    %v1375 = vrot.slane %v1361, %v1374
    %v1376 = vcombine.low %v1311, %v1327
    %v1377 = vcombine.high %v1311, %v1327
    %v1379 = vunpack.c.l.s4 1934713408
    %v1380 = vunpack.c.0.s8 %v1379
    %v1381 = vlaneseq
    %v1382 = vshrl.u32 %v1381, 7
    %v1383 = vsub.s32 %v1380, %v1382
    %v1384 = vrot.slane %v1376, %v1383
    %v1386 = vunpack.c.l.s4 1934713408
    %v1387 = vunpack.c.0.s8 %v1386
    %v1388 = vlaneseq
    %v1389 = vshrl.u32 %v1388, 7
    %v1390 = vsub.s32 %v1387, %v1389
    %v1391 = vrot.slane %v1377, %v1390
    %v1392 = vcombine.low %v1336, %v1368
    %v1393 = vcombine.high %v1336, %v1368
    %v1394 = vcombine.low %v1343, %v1375
    %v1395 = vcombine.high %v1343, %v1375
    %v1396 = vcombine.low %v1352, %v1384
    %v1397 = vcombine.high %v1352, %v1384
    %v1398 = vcombine.low %v1359, %v1391
    %v1399 = vcombine.high %v1359, %v1391
    %v1400 = vcombine.low %v223, %v231
    %v1401 = vcombine.high %v223, %v231
    %v1403 = vunpack.c.l.s4 1983009808
    %v1404 = vunpack.c.0.s8 %v1403
    %v1405 = vlaneseq
    %v1406 = vshrl.u32 %v1405, 7
    %v1407 = vsub.s32 %v1404, %v1406
    %v1408 = vrot.slane %v1400, %v1407
    %v1410 = vunpack.c.l.s4 1983009808
    %v1411 = vunpack.c.0.s8 %v1410
    %v1412 = vlaneseq
    %v1413 = vshrl.u32 %v1412, 7
    %v1414 = vsub.s32 %v1411, %v1413
    %v1415 = vrot.slane %v1401, %v1414
    %v1416 = vcombine.low %v227, %v235
    %v1417 = vcombine.high %v227, %v235
    %v1419 = vunpack.c.l.s4 1983009808
    %v1420 = vunpack.c.0.s8 %v1419
    %v1421 = vlaneseq
    %v1422 = vshrl.u32 %v1421, 7
    %v1423 = vsub.s32 %v1420, %v1422
    %v1424 = vrot.slane %v1416, %v1423
    %v1426 = vunpack.c.l.s4 1983009808
    %v1427 = vunpack.c.0.s8 %v1426
    %v1428 = vlaneseq
    %v1429 = vshrl.u32 %v1428, 7
    %v1430 = vsub.s32 %v1427, %v1429
    %v1431 = vrot.slane %v1417, %v1430
    %v1432 = vcombine.low %v1408, %v1424
    %v1433 = vcombine.high %v1408, %v1424
    %v1435 = vunpack.c.l.s4 1934713408
    %v1436 = vunpack.c.0.s8 %v1435
    %v1437 = vlaneseq
    %v1438 = vshrl.u32 %v1437, 7
    %v1439 = vsub.s32 %v1436, %v1438
    %v1440 = vrot.slane %v1432, %v1439
    %v1442 = vunpack.c.l.s4 1934713408
    %v1443 = vunpack.c.0.s8 %v1442
    %v1444 = vlaneseq
    %v1445 = vshrl.u32 %v1444, 7
    %v1446 = vsub.s32 %v1443, %v1445
    %v1447 = vrot.slane %v1433, %v1446
    %v1448 = vcombine.low %v1415, %v1431
    %v1449 = vcombine.high %v1415, %v1431
    %v1451 = vunpack.c.l.s4 1934713408
    %v1452 = vunpack.c.0.s8 %v1451
    %v1453 = vlaneseq
    %v1454 = vshrl.u32 %v1453, 7
    %v1455 = vsub.s32 %v1452, %v1454
    %v1456 = vrot.slane %v1448, %v1455
    %v1458 = vunpack.c.l.s4 1934713408
    %v1459 = vunpack.c.0.s8 %v1458
    %v1460 = vlaneseq
    %v1461 = vshrl.u32 %v1460, 7
    %v1462 = vsub.s32 %v1459, %v1461
    %v1463 = vrot.slane %v1449, %v1462
    %v1464 = vcombine.high %v1440, 0.0
    %v1465 = vcombine.high %v1447, 0.0
    %v1466 = vcombine.high %v1456, 0.0
    %v1467 = vcombine.high %v1463, 0.0
    %1473 = vrot.lane.b32.xlu0 %v373, 16
    %v1474 = vpop.permute.xlu0 %1473
    %1475 = vrot.lane.b32.xlu0 %v509, 16
    %v1476 = vpop.permute.xlu0 %1475
    %1477 = vrot.lane.b32.xlu0 %v645, 16
    %v1478 = vpop.permute.xlu0 %1477
    %1479 = vrot.lane.b32.xlu0 %v781, 16
    %v1480 = vpop.permute.xlu0 %1479
    %1481 = vrot.lane.b32.xlu0 %v852, 16
    %v1482 = vpop.permute.xlu0 %1481
    %1493 = vrot.lane.b32.xlu0 %v374, 32
    %v1494 = vpop.permute.xlu0 %1493
    %1495 = vrot.lane.b32.xlu0 %v510, 32
    %v1496 = vpop.permute.xlu0 %1495
    %1497 = vrot.lane.b32.xlu0 %v646, 32
    %v1498 = vpop.permute.xlu0 %1497
    %1499 = vrot.lane.b32.xlu0 %v782, 32
    %v1500 = vpop.permute.xlu0 %1499
    %1501 = vrot.lane.b32.xlu0 %v835, 32
    %v1502 = vpop.permute.xlu0 %1501
    %1513 = vrot.lane.b32.xlu0 %v375, 48
    %v1514 = vpop.permute.xlu0 %1513
    %1515 = vrot.lane.b32.xlu0 %v511, 48
    %v1516 = vpop.permute.xlu0 %1515
    %1517 = vrot.lane.b32.xlu0 %v647, 48
    %v1518 = vpop.permute.xlu0 %1517
    %1519 = vrot.lane.b32.xlu0 %v783, 48
    %v1520 = vpop.permute.xlu0 %1519
    %1521 = vrot.lane.b32.xlu0 %v853, 48
    %v1522 = vpop.permute.xlu0 %1521
    %1533 = vrot.lane.b32.xlu0 %v376, 64
    %v1534 = vpop.permute.xlu0 %1533
    %1535 = vrot.lane.b32.xlu0 %v512, 64
    %v1536 = vpop.permute.xlu0 %1535
    %1537 = vrot.lane.b32.xlu0 %v648, 64
    %v1538 = vpop.permute.xlu0 %1537
    %1539 = vrot.lane.b32.xlu0 %v784, 64
    %v1540 = vpop.permute.xlu0 %1539
    %1541 = vrot.lane.b32.xlu0 %v844, 64
    %v1542 = vpop.permute.xlu0 %1541
    %1553 = vrot.lane.b32.xlu0 %v377, 80
    %v1554 = vpop.permute.xlu0 %1553
    %1555 = vrot.lane.b32.xlu0 %v513, 80
    %v1556 = vpop.permute.xlu0 %1555
    %1557 = vrot.lane.b32.xlu0 %v649, 80
    %v1558 = vpop.permute.xlu0 %1557
    %1559 = vrot.lane.b32.xlu0 %v785, 80
    %v1560 = vpop.permute.xlu0 %1559
    %1561 = vrot.lane.b32.xlu0 %v854, 80
    %v1562 = vpop.permute.xlu0 %1561
    %1573 = vrot.lane.b32.xlu0 %v378, 96
    %v1574 = vpop.permute.xlu0 %1573
    %1575 = vrot.lane.b32.xlu0 %v514, 96
    %v1576 = vpop.permute.xlu0 %1575
    %1577 = vrot.lane.b32.xlu0 %v650, 96
    %v1578 = vpop.permute.xlu0 %1577
    %1579 = vrot.lane.b32.xlu0 %v786, 96
    %v1580 = vpop.permute.xlu0 %1579
    %1581 = vrot.lane.b32.xlu0 %v851, 96
    %v1582 = vpop.permute.xlu0 %1581
    %1593 = vrot.lane.b32.xlu0 %v379, 112
    %v1594 = vpop.permute.xlu0 %1593
    %1595 = vrot.lane.b32.xlu0 %v515, 112
    %v1596 = vpop.permute.xlu0 %1595
    %1597 = vrot.lane.b32.xlu0 %v651, 112
    %v1598 = vpop.permute.xlu0 %1597
    %1599 = vrot.lane.b32.xlu0 %v787, 112
    %v1600 = vpop.permute.xlu0 %1599
    %1601 = vrot.lane.b32.xlu0 %v855, 112
    %v1602 = vpop.permute.xlu0 %1601
    %1613 = vrot.lane.b32.xlu0 %v985, 16
    %v1614 = vpop.permute.xlu0 %1613
    %1615 = vrot.lane.b32.xlu0 %v1121, 16
    %v1616 = vpop.permute.xlu0 %1615
    %1617 = vrot.lane.b32.xlu0 %v1257, 16
    %v1618 = vpop.permute.xlu0 %1617
    %1619 = vrot.lane.b32.xlu0 %v1393, 16
    %v1620 = vpop.permute.xlu0 %1619
    %1621 = vrot.lane.b32.xlu0 %v1464, 16
    %v1622 = vpop.permute.xlu0 %1621
    %1633 = vrot.lane.b32.xlu0 %v986, 32
    %v1634 = vpop.permute.xlu0 %1633
    %1635 = vrot.lane.b32.xlu0 %v1122, 32
    %v1636 = vpop.permute.xlu0 %1635
    %1637 = vrot.lane.b32.xlu0 %v1258, 32
    %v1638 = vpop.permute.xlu0 %1637
    %1639 = vrot.lane.b32.xlu0 %v1394, 32
    %v1640 = vpop.permute.xlu0 %1639
    %1641 = vrot.lane.b32.xlu0 %v1447, 32
    %v1642 = vpop.permute.xlu0 %1641
    %1653 = vrot.lane.b32.xlu0 %v987, 48
    %v1654 = vpop.permute.xlu0 %1653
    %1655 = vrot.lane.b32.xlu0 %v1123, 48
    %v1656 = vpop.permute.xlu0 %1655
    %1657 = vrot.lane.b32.xlu0 %v1259, 48
    %v1658 = vpop.permute.xlu0 %1657
    %1659 = vrot.lane.b32.xlu0 %v1395, 48
    %v1660 = vpop.permute.xlu0 %1659
    %1661 = vrot.lane.b32.xlu0 %v1465, 48
    %v1662 = vpop.permute.xlu0 %1661
    %1673 = vrot.lane.b32.xlu0 %v988, 64
    %v1674 = vpop.permute.xlu0 %1673
    %1675 = vrot.lane.b32.xlu0 %v1124, 64
    %v1676 = vpop.permute.xlu0 %1675
    %1677 = vrot.lane.b32.xlu0 %v1260, 64
    %v1678 = vpop.permute.xlu0 %1677
    %1679 = vrot.lane.b32.xlu0 %v1396, 64
    %v1680 = vpop.permute.xlu0 %1679
    %1681 = vrot.lane.b32.xlu0 %v1456, 64
    %v1682 = vpop.permute.xlu0 %1681
    %1693 = vrot.lane.b32.xlu0 %v989, 80
    %v1694 = vpop.permute.xlu0 %1693
    %1695 = vrot.lane.b32.xlu0 %v1125, 80
    %v1696 = vpop.permute.xlu0 %1695
    %1697 = vrot.lane.b32.xlu0 %v1261, 80
    %v1698 = vpop.permute.xlu0 %1697
    %1699 = vrot.lane.b32.xlu0 %v1397, 80
    %v1700 = vpop.permute.xlu0 %1699
    %1701 = vrot.lane.b32.xlu0 %v1466, 80
    %v1702 = vpop.permute.xlu0 %1701
    %1713 = vrot.lane.b32.xlu0 %v990, 96
    %v1714 = vpop.permute.xlu0 %1713
    %1715 = vrot.lane.b32.xlu0 %v1126, 96
    %v1716 = vpop.permute.xlu0 %1715
    %1717 = vrot.lane.b32.xlu0 %v1262, 96
    %v1718 = vpop.permute.xlu0 %1717
    %1719 = vrot.lane.b32.xlu0 %v1398, 96
    %v1720 = vpop.permute.xlu0 %1719
    %1721 = vrot.lane.b32.xlu0 %v1463, 96
    %v1722 = vpop.permute.xlu0 %1721
    %1733 = vrot.lane.b32.xlu0 %v991, 112
    %v1734 = vpop.permute.xlu0 %1733
    %1735 = vrot.lane.b32.xlu0 %v1127, 112
    %v1736 = vpop.permute.xlu0 %1735
    %1737 = vrot.lane.b32.xlu0 %v1263, 112
    %v1738 = vpop.permute.xlu0 %1737
    %1739 = vrot.lane.b32.xlu0 %v1399, 112
    %v1740 = vpop.permute.xlu0 %1739
    %1741 = vrot.lane.b32.xlu0 %v1467, 112
    %v1742 = vpop.permute.xlu0 %1741
    %vm1748 = vcmask 130048
    %v1749 = vsel %vm1748, %v372, %v1474
    %v1750 = vsel %vm1748, %v508, %v1476
    %v1751 = vsel %vm1748, %v644, %v1478
    %v1752 = vsel %vm1748, %v780, %v1480
    %v1753 = vsel %vm1748, %v828, %v1482
    %vm1754 = vcmask 261120
    %v1755 = vsel %vm1754, %v1749, %v1494
    %v1756 = vsel %vm1754, %v1750, %v1496
    %v1757 = vsel %vm1754, %v1751, %v1498
    %v1758 = vsel %vm1754, %v1752, %v1500
    %v1759 = vsel %vm1754, %v1753, %v1502
    %vm1760 = vcmask 392192
    %v1761 = vsel %vm1760, %v1755, %v1514
    %v1762 = vsel %vm1760, %v1756, %v1516
    %v1763 = vsel %vm1760, %v1757, %v1518
    %v1764 = vsel %vm1760, %v1758, %v1520
    %v1765 = vsel %vm1760, %v1759, %v1522
    %vm1766 = vcmask 523264
    %v1767 = vsel %vm1766, %v1761, %v1534
    %v1768 = vsel %vm1766, %v1762, %v1536
    %v1769 = vsel %vm1766, %v1763, %v1538
    %v1770 = vsel %vm1766, %v1764, %v1540
    %v1771 = vsel %vm1766, %v1765, %v1542
    %vm1772 = vcmask 654336
    %v1773 = vsel %vm1772, %v1767, %v1554
    %v1774 = vsel %vm1772, %v1768, %v1556
    %v1775 = vsel %vm1772, %v1769, %v1558
    %v1776 = vsel %vm1772, %v1770, %v1560
    %v1777 = vsel %vm1772, %v1771, %v1562
    %vm1778 = vcmask 785408
    %v1779 = vsel %vm1778, %v1773, %v1574
    %v1780 = vsel %vm1778, %v1774, %v1576
    %v1781 = vsel %vm1778, %v1775, %v1578
    %v1782 = vsel %vm1778, %v1776, %v1580
    %v1783 = vsel %vm1778, %v1777, %v1582
    %vm1784 = vcmask 916480
    %v1785 = vsel %vm1784, %v1779, %v1594
    %v1786 = vsel %vm1784, %v1780, %v1596
    %v1787 = vsel %vm1784, %v1781, %v1598
    %v1788 = vsel %vm1784, %v1782, %v1600
    %v1789 = vsel %vm1784, %v1783, %v1602
    %v1790 = vsel %vm1748, %v984, %v1614
    %v1791 = vsel %vm1748, %v1120, %v1616
    %v1792 = vsel %vm1748, %v1256, %v1618
    %v1793 = vsel %vm1748, %v1392, %v1620
    %v1794 = vsel %vm1748, %v1440, %v1622
    %v1795 = vsel %vm1754, %v1790, %v1634
    %v1796 = vsel %vm1754, %v1791, %v1636
    %v1797 = vsel %vm1754, %v1792, %v1638
    %v1798 = vsel %vm1754, %v1793, %v1640
    %v1799 = vsel %vm1754, %v1794, %v1642
    %v1800 = vsel %vm1760, %v1795, %v1654
    %v1801 = vsel %vm1760, %v1796, %v1656
    %v1802 = vsel %vm1760, %v1797, %v1658
    %v1803 = vsel %vm1760, %v1798, %v1660
    %v1804 = vsel %vm1760, %v1799, %v1662
    %v1805 = vsel %vm1766, %v1800, %v1674
    %v1806 = vsel %vm1766, %v1801, %v1676
    %v1807 = vsel %vm1766, %v1802, %v1678
    %v1808 = vsel %vm1766, %v1803, %v1680
    %v1809 = vsel %vm1766, %v1804, %v1682
    %v1810 = vsel %vm1772, %v1805, %v1694
    %v1811 = vsel %vm1772, %v1806, %v1696
    %v1812 = vsel %vm1772, %v1807, %v1698
    %v1813 = vsel %vm1772, %v1808, %v1700
    %v1814 = vsel %vm1772, %v1809, %v1702
    %v1815 = vsel %vm1778, %v1810, %v1714
    %v1816 = vsel %vm1778, %v1811, %v1716
    %v1817 = vsel %vm1778, %v1812, %v1718
    %v1818 = vsel %vm1778, %v1813, %v1720
    %v1819 = vsel %vm1778, %v1814, %v1722
    %v1820 = vsel %vm1784, %v1815, %v1734
    %v1821 = vsel %vm1784, %v1816, %v1736
    %v1822 = vsel %vm1784, %v1817, %v1738
    %v1823 = vsel %vm1784, %v1818, %v1740
    %v1824 = vsel %vm1784, %v1819, %v1742
    %s1825 = scalar_lea.vmem %s0, 96
    %v1826 = vld [vmem:[%s1825] sm:$0xff]
    %v1827 = vld [vmem:[%s1825 + $0x8] sm:$0xff]
    %v1828 = vld [vmem:[%s1825 + $0x10] sm:$0x3]
    %v1829 = vld [vmem:[%s1825 + $0x18] sm:$0xff]
    %v1830 = vld [vmem:[%s1825 + $0x20] sm:$0xff]
    %v1831 = vld [vmem:[%s1825 + $0x28] sm:$0x3]
    %v1832 = vld [vmem:[%s1825 + $0x30] sm:$0xff]
    %v1833 = vld [vmem:[%s1825 + $0x38] sm:$0xff]
    %v1834 = vld [vmem:[%s1825 + $0x40] sm:$0x3]
    %v1835 = vld [vmem:[%s1825 + $0x48] sm:$0xff]
    %v1836 = vld [vmem:[%s1825 + $0x50] sm:$0xff]
    %v1837 = vld [vmem:[%s1825 + $0x58] sm:$0x3]
    %1846 = vrot.lane.b32.xlu0 %v1826, 127
    %v1847 = vpop.permute.xlu0 %1846
    %1848 = vrot.lane.b32.xlu0 %v1827, 127
    %v1849 = vpop.permute.xlu0 %1848
    %1850 = vrot.lane.b32.xlu0 %v1829, 127
    %v1851 = vpop.permute.xlu0 %1850
    %1852 = vrot.lane.b32.xlu0 %v1830, 127
    %v1853 = vpop.permute.xlu0 %1852
    %1854 = vrot.lane.b32.xlu0 %v1832, 127
    %v1855 = vpop.permute.xlu0 %1854
    %1856 = vrot.lane.b32.xlu0 %v1833, 127
    %v1857 = vpop.permute.xlu0 %1856
    %1858 = vrot.lane.b32.xlu0 %v1835, 127
    %v1859 = vpop.permute.xlu0 %1858
    %1860 = vrot.lane.b32.xlu0 %v1836, 127
    %v1861 = vpop.permute.xlu0 %1860
    %1870 = vrot.lane.b32.xlu0 %v1826, 126
    %v1871 = vpop.permute.xlu0 %1870
    %1872 = vrot.lane.b32.xlu0 %v1827, 126
    %v1873 = vpop.permute.xlu0 %1872
    %1874 = vrot.lane.b32.xlu0 %v1829, 126
    %v1875 = vpop.permute.xlu0 %1874
    %1876 = vrot.lane.b32.xlu0 %v1830, 126
    %v1877 = vpop.permute.xlu0 %1876
    %1878 = vrot.lane.b32.xlu0 %v1832, 126
    %v1879 = vpop.permute.xlu0 %1878
    %1880 = vrot.lane.b32.xlu0 %v1833, 126
    %v1881 = vpop.permute.xlu0 %1880
    %1882 = vrot.lane.b32.xlu0 %v1835, 126
    %v1883 = vpop.permute.xlu0 %1882
    %1884 = vrot.lane.b32.xlu0 %v1836, 126
    %v1885 = vpop.permute.xlu0 %1884
    %v1898 = vrot.slane %v1826, 1
    %v1899 = vrot.slane %v1827, 1
    %v1900 = vsel %vm90, %v1898, %v1899
    %v1901 = vrot.slane %v1828, 1
    %v1902 = vsel %vm90, %v1899, %v1901
    %v1903 = vrot.slane %v1829, 1
    %v1904 = vrot.slane %v1830, 1
    %v1905 = vsel %vm90, %v1903, %v1904
    %v1906 = vrot.slane %v1831, 1
    %v1907 = vsel %vm90, %v1904, %v1906
    %v1908 = vrot.slane %v1832, 1
    %v1909 = vrot.slane %v1833, 1
    %v1910 = vsel %vm90, %v1908, %v1909
    %v1911 = vrot.slane %v1834, 1
    %v1912 = vsel %vm90, %v1909, %v1911
    %v1913 = vrot.slane %v1835, 1
    %v1914 = vrot.slane %v1836, 1
    %v1915 = vsel %vm90, %v1913, %v1914
    %v1916 = vrot.slane %v1837, 1
    %v1917 = vsel %vm90, %v1914, %v1916
    %1926 = vrot.lane.b32.xlu0 %v1900, 127
    %v1927 = vpop.permute.xlu0 %1926
    %1928 = vrot.lane.b32.xlu0 %v1902, 127
    %v1929 = vpop.permute.xlu0 %1928
    %1930 = vrot.lane.b32.xlu0 %v1905, 127
    %v1931 = vpop.permute.xlu0 %1930
    %1932 = vrot.lane.b32.xlu0 %v1907, 127
    %v1933 = vpop.permute.xlu0 %1932
    %1934 = vrot.lane.b32.xlu0 %v1910, 127
    %v1935 = vpop.permute.xlu0 %1934
    %1936 = vrot.lane.b32.xlu0 %v1912, 127
    %v1937 = vpop.permute.xlu0 %1936
    %1938 = vrot.lane.b32.xlu0 %v1915, 127
    %v1939 = vpop.permute.xlu0 %1938
    %1940 = vrot.lane.b32.xlu0 %v1917, 127
    %v1941 = vpop.permute.xlu0 %1940
    %1950 = vrot.lane.b32.xlu0 %v1900, 126
    %v1951 = vpop.permute.xlu0 %1950
    %1952 = vrot.lane.b32.xlu0 %v1902, 126
    %v1953 = vpop.permute.xlu0 %1952
    %1954 = vrot.lane.b32.xlu0 %v1905, 126
    %v1955 = vpop.permute.xlu0 %1954
    %1956 = vrot.lane.b32.xlu0 %v1907, 126
    %v1957 = vpop.permute.xlu0 %1956
    %1958 = vrot.lane.b32.xlu0 %v1910, 126
    %v1959 = vpop.permute.xlu0 %1958
    %1960 = vrot.lane.b32.xlu0 %v1912, 126
    %v1961 = vpop.permute.xlu0 %1960
    %1962 = vrot.lane.b32.xlu0 %v1915, 126
    %v1963 = vpop.permute.xlu0 %1962
    %1964 = vrot.lane.b32.xlu0 %v1917, 126
    %v1965 = vpop.permute.xlu0 %1964
    %v1974 = vrot.slane %v1826, 2
    %v1975 = vrot.slane %v1827, 2
    %v1976 = vsel %vm167, %v1974, %v1975
    %v1977 = vrot.slane %v1828, 2
    %v1978 = vsel %vm167, %v1975, %v1977
    %v1979 = vrot.slane %v1829, 2
    %v1980 = vrot.slane %v1830, 2
    %v1981 = vsel %vm167, %v1979, %v1980
    %v1982 = vrot.slane %v1831, 2
    %v1983 = vsel %vm167, %v1980, %v1982
    %v1984 = vrot.slane %v1832, 2
    %v1985 = vrot.slane %v1833, 2
    %v1986 = vsel %vm167, %v1984, %v1985
    %v1987 = vrot.slane %v1834, 2
    %v1988 = vsel %vm167, %v1985, %v1987
    %v1989 = vrot.slane %v1835, 2
    %v1990 = vrot.slane %v1836, 2
    %v1991 = vsel %vm167, %v1989, %v1990
    %v1992 = vrot.slane %v1837, 2
    %v1993 = vsel %vm167, %v1990, %v1992
    %2002 = vrot.lane.b32.xlu0 %v1976, 127
    %v2003 = vpop.permute.xlu0 %2002
    %2004 = vrot.lane.b32.xlu0 %v1978, 127
    %v2005 = vpop.permute.xlu0 %2004
    %2006 = vrot.lane.b32.xlu0 %v1981, 127
    %v2007 = vpop.permute.xlu0 %2006
    %2008 = vrot.lane.b32.xlu0 %v1983, 127
    %v2009 = vpop.permute.xlu0 %2008
    %2010 = vrot.lane.b32.xlu0 %v1986, 127
    %v2011 = vpop.permute.xlu0 %2010
    %2012 = vrot.lane.b32.xlu0 %v1988, 127
    %v2013 = vpop.permute.xlu0 %2012
    %2014 = vrot.lane.b32.xlu0 %v1991, 127
    %v2015 = vpop.permute.xlu0 %2014
    %2016 = vrot.lane.b32.xlu0 %v1993, 127
    %v2017 = vpop.permute.xlu0 %2016
    %2026 = vrot.lane.b32.xlu0 %v1976, 126
    %v2027 = vpop.permute.xlu0 %2026
    %2028 = vrot.lane.b32.xlu0 %v1978, 126
    %v2029 = vpop.permute.xlu0 %2028
    %2030 = vrot.lane.b32.xlu0 %v1981, 126
    %v2031 = vpop.permute.xlu0 %2030
    %2032 = vrot.lane.b32.xlu0 %v1983, 126
    %v2033 = vpop.permute.xlu0 %2032
    %2034 = vrot.lane.b32.xlu0 %v1986, 126
    %v2035 = vpop.permute.xlu0 %2034
    %2036 = vrot.lane.b32.xlu0 %v1988, 126
    %v2037 = vpop.permute.xlu0 %2036
    %2038 = vrot.lane.b32.xlu0 %v1991, 126
    %v2039 = vpop.permute.xlu0 %2038
    %2040 = vrot.lane.b32.xlu0 %v1993, 126
    %v2041 = vpop.permute.xlu0 %2040
    %v2050 = vcombine.low %v1826, %v1832
    %v2051 = vcombine.high %v1826, %v1832
    %v2053 = vunpack.c.l.s4 1983009808
    %v2054 = vunpack.c.0.s8 %v2053
    %v2055 = vlaneseq
    %v2056 = vshrl.u32 %v2055, 7
    %v2057 = vsub.s32 %v2054, %v2056
    %v2058 = vrot.slane %v2050, %v2057
    %v2060 = vunpack.c.l.s4 1983009808
    %v2061 = vunpack.c.0.s8 %v2060
    %v2062 = vlaneseq
    %v2063 = vshrl.u32 %v2062, 7
    %v2064 = vsub.s32 %v2061, %v2063
    %v2065 = vrot.slane %v2051, %v2064
    %v2066 = vcombine.low %v1829, %v1835
    %v2067 = vcombine.high %v1829, %v1835
    %v2069 = vunpack.c.l.s4 1983009808
    %v2070 = vunpack.c.0.s8 %v2069
    %v2071 = vlaneseq
    %v2072 = vshrl.u32 %v2071, 7
    %v2073 = vsub.s32 %v2070, %v2072
    %v2074 = vrot.slane %v2066, %v2073
    %v2076 = vunpack.c.l.s4 1983009808
    %v2077 = vunpack.c.0.s8 %v2076
    %v2078 = vlaneseq
    %v2079 = vshrl.u32 %v2078, 7
    %v2080 = vsub.s32 %v2077, %v2079
    %v2081 = vrot.slane %v2067, %v2080
    %v2082 = vcombine.low %v1847, %v1855
    %v2083 = vcombine.high %v1847, %v1855
    %v2085 = vunpack.c.l.s4 1983009808
    %v2086 = vunpack.c.0.s8 %v2085
    %v2087 = vlaneseq
    %v2088 = vshrl.u32 %v2087, 7
    %v2089 = vsub.s32 %v2086, %v2088
    %v2090 = vrot.slane %v2082, %v2089
    %v2092 = vunpack.c.l.s4 1983009808
    %v2093 = vunpack.c.0.s8 %v2092
    %v2094 = vlaneseq
    %v2095 = vshrl.u32 %v2094, 7
    %v2096 = vsub.s32 %v2093, %v2095
    %v2097 = vrot.slane %v2083, %v2096
    %v2098 = vcombine.low %v1851, %v1859
    %v2099 = vcombine.high %v1851, %v1859
    %v2101 = vunpack.c.l.s4 1983009808
    %v2102 = vunpack.c.0.s8 %v2101
    %v2103 = vlaneseq
    %v2104 = vshrl.u32 %v2103, 7
    %v2105 = vsub.s32 %v2102, %v2104
    %v2106 = vrot.slane %v2098, %v2105
    %v2108 = vunpack.c.l.s4 1983009808
    %v2109 = vunpack.c.0.s8 %v2108
    %v2110 = vlaneseq
    %v2111 = vshrl.u32 %v2110, 7
    %v2112 = vsub.s32 %v2109, %v2111
    %v2113 = vrot.slane %v2099, %v2112
    %v2114 = vcombine.low %v2058, %v2074
    %v2115 = vcombine.high %v2058, %v2074
    %v2117 = vunpack.c.l.s4 1934713408
    %v2118 = vunpack.c.0.s8 %v2117
    %v2119 = vlaneseq
    %v2120 = vshrl.u32 %v2119, 7
    %v2121 = vsub.s32 %v2118, %v2120
    %v2122 = vrot.slane %v2114, %v2121
    %v2124 = vunpack.c.l.s4 1934713408
    %v2125 = vunpack.c.0.s8 %v2124
    %v2126 = vlaneseq
    %v2127 = vshrl.u32 %v2126, 7
    %v2128 = vsub.s32 %v2125, %v2127
    %v2129 = vrot.slane %v2115, %v2128
    %v2130 = vcombine.low %v2065, %v2081
    %v2131 = vcombine.high %v2065, %v2081
    %v2133 = vunpack.c.l.s4 1934713408
    %v2134 = vunpack.c.0.s8 %v2133
    %v2135 = vlaneseq
    %v2136 = vshrl.u32 %v2135, 7
    %v2137 = vsub.s32 %v2134, %v2136
    %v2138 = vrot.slane %v2130, %v2137
    %v2140 = vunpack.c.l.s4 1934713408
    %v2141 = vunpack.c.0.s8 %v2140
    %v2142 = vlaneseq
    %v2143 = vshrl.u32 %v2142, 7
    %v2144 = vsub.s32 %v2141, %v2143
    %v2145 = vrot.slane %v2131, %v2144
    %v2146 = vcombine.low %v2090, %v2106
    %v2147 = vcombine.high %v2090, %v2106
    %v2149 = vunpack.c.l.s4 1934713408
    %v2150 = vunpack.c.0.s8 %v2149
    %v2151 = vlaneseq
    %v2152 = vshrl.u32 %v2151, 7
    %v2153 = vsub.s32 %v2150, %v2152
    %v2154 = vrot.slane %v2146, %v2153
    %v2156 = vunpack.c.l.s4 1934713408
    %v2157 = vunpack.c.0.s8 %v2156
    %v2158 = vlaneseq
    %v2159 = vshrl.u32 %v2158, 7
    %v2160 = vsub.s32 %v2157, %v2159
    %v2161 = vrot.slane %v2147, %v2160
    %v2162 = vcombine.low %v2097, %v2113
    %v2163 = vcombine.high %v2097, %v2113
    %v2165 = vunpack.c.l.s4 1934713408
    %v2166 = vunpack.c.0.s8 %v2165
    %v2167 = vlaneseq
    %v2168 = vshrl.u32 %v2167, 7
    %v2169 = vsub.s32 %v2166, %v2168
    %v2170 = vrot.slane %v2162, %v2169
    %v2172 = vunpack.c.l.s4 1934713408
    %v2173 = vunpack.c.0.s8 %v2172
    %v2174 = vlaneseq
    %v2175 = vshrl.u32 %v2174, 7
    %v2176 = vsub.s32 %v2173, %v2175
    %v2177 = vrot.slane %v2163, %v2176
    %v2178 = vcombine.low %v2122, %v2154
    %v2179 = vcombine.high %v2122, %v2154
    %v2180 = vcombine.low %v2129, %v2161
    %v2181 = vcombine.high %v2129, %v2161
    %v2182 = vcombine.low %v2138, %v2170
    %v2183 = vcombine.high %v2138, %v2170
    %v2184 = vcombine.low %v2145, %v2177
    %v2185 = vcombine.high %v2145, %v2177
    %v2186 = vcombine.low %v1871, %v1879
    %v2187 = vcombine.high %v1871, %v1879
    %v2189 = vunpack.c.l.s4 1983009808
    %v2190 = vunpack.c.0.s8 %v2189
    %v2191 = vlaneseq
    %v2192 = vshrl.u32 %v2191, 7
    %v2193 = vsub.s32 %v2190, %v2192
    %v2194 = vrot.slane %v2186, %v2193
    %v2196 = vunpack.c.l.s4 1983009808
    %v2197 = vunpack.c.0.s8 %v2196
    %v2198 = vlaneseq
    %v2199 = vshrl.u32 %v2198, 7
    %v2200 = vsub.s32 %v2197, %v2199
    %v2201 = vrot.slane %v2187, %v2200
    %v2202 = vcombine.low %v1875, %v1883
    %v2203 = vcombine.high %v1875, %v1883
    %v2205 = vunpack.c.l.s4 1983009808
    %v2206 = vunpack.c.0.s8 %v2205
    %v2207 = vlaneseq
    %v2208 = vshrl.u32 %v2207, 7
    %v2209 = vsub.s32 %v2206, %v2208
    %v2210 = vrot.slane %v2202, %v2209
    %v2212 = vunpack.c.l.s4 1983009808
    %v2213 = vunpack.c.0.s8 %v2212
    %v2214 = vlaneseq
    %v2215 = vshrl.u32 %v2214, 7
    %v2216 = vsub.s32 %v2213, %v2215
    %v2217 = vrot.slane %v2203, %v2216
    %v2218 = vcombine.low %v1900, %v1910
    %v2219 = vcombine.high %v1900, %v1910
    %v2221 = vunpack.c.l.s4 1983009808
    %v2222 = vunpack.c.0.s8 %v2221
    %v2223 = vlaneseq
    %v2224 = vshrl.u32 %v2223, 7
    %v2225 = vsub.s32 %v2222, %v2224
    %v2226 = vrot.slane %v2218, %v2225
    %v2228 = vunpack.c.l.s4 1983009808
    %v2229 = vunpack.c.0.s8 %v2228
    %v2230 = vlaneseq
    %v2231 = vshrl.u32 %v2230, 7
    %v2232 = vsub.s32 %v2229, %v2231
    %v2233 = vrot.slane %v2219, %v2232
    %v2234 = vcombine.low %v1905, %v1915
    %v2235 = vcombine.high %v1905, %v1915
    %v2237 = vunpack.c.l.s4 1983009808
    %v2238 = vunpack.c.0.s8 %v2237
    %v2239 = vlaneseq
    %v2240 = vshrl.u32 %v2239, 7
    %v2241 = vsub.s32 %v2238, %v2240
    %v2242 = vrot.slane %v2234, %v2241
    %v2244 = vunpack.c.l.s4 1983009808
    %v2245 = vunpack.c.0.s8 %v2244
    %v2246 = vlaneseq
    %v2247 = vshrl.u32 %v2246, 7
    %v2248 = vsub.s32 %v2245, %v2247
    %v2249 = vrot.slane %v2235, %v2248
    %v2250 = vcombine.low %v2194, %v2210
    %v2251 = vcombine.high %v2194, %v2210
    %v2253 = vunpack.c.l.s4 1934713408
    %v2254 = vunpack.c.0.s8 %v2253
    %v2255 = vlaneseq
    %v2256 = vshrl.u32 %v2255, 7
    %v2257 = vsub.s32 %v2254, %v2256
    %v2258 = vrot.slane %v2250, %v2257
    %v2260 = vunpack.c.l.s4 1934713408
    %v2261 = vunpack.c.0.s8 %v2260
    %v2262 = vlaneseq
    %v2263 = vshrl.u32 %v2262, 7
    %v2264 = vsub.s32 %v2261, %v2263
    %v2265 = vrot.slane %v2251, %v2264
    %v2266 = vcombine.low %v2201, %v2217
    %v2267 = vcombine.high %v2201, %v2217
    %v2269 = vunpack.c.l.s4 1934713408
    %v2270 = vunpack.c.0.s8 %v2269
    %v2271 = vlaneseq
    %v2272 = vshrl.u32 %v2271, 7
    %v2273 = vsub.s32 %v2270, %v2272
    %v2274 = vrot.slane %v2266, %v2273
    %v2276 = vunpack.c.l.s4 1934713408
    %v2277 = vunpack.c.0.s8 %v2276
    %v2278 = vlaneseq
    %v2279 = vshrl.u32 %v2278, 7
    %v2280 = vsub.s32 %v2277, %v2279
    %v2281 = vrot.slane %v2267, %v2280
    %v2282 = vcombine.low %v2226, %v2242
    %v2283 = vcombine.high %v2226, %v2242
    %v2285 = vunpack.c.l.s4 1934713408
    %v2286 = vunpack.c.0.s8 %v2285
    %v2287 = vlaneseq
    %v2288 = vshrl.u32 %v2287, 7
    %v2289 = vsub.s32 %v2286, %v2288
    %v2290 = vrot.slane %v2282, %v2289
    %v2292 = vunpack.c.l.s4 1934713408
    %v2293 = vunpack.c.0.s8 %v2292
    %v2294 = vlaneseq
    %v2295 = vshrl.u32 %v2294, 7
    %v2296 = vsub.s32 %v2293, %v2295
    %v2297 = vrot.slane %v2283, %v2296
    %v2298 = vcombine.low %v2233, %v2249
    %v2299 = vcombine.high %v2233, %v2249
    %v2301 = vunpack.c.l.s4 1934713408
    %v2302 = vunpack.c.0.s8 %v2301
    %v2303 = vlaneseq
    %v2304 = vshrl.u32 %v2303, 7
    %v2305 = vsub.s32 %v2302, %v2304
    %v2306 = vrot.slane %v2298, %v2305
    %v2308 = vunpack.c.l.s4 1934713408
    %v2309 = vunpack.c.0.s8 %v2308
    %v2310 = vlaneseq
    %v2311 = vshrl.u32 %v2310, 7
    %v2312 = vsub.s32 %v2309, %v2311
    %v2313 = vrot.slane %v2299, %v2312
    %v2314 = vcombine.low %v2258, %v2290
    %v2315 = vcombine.high %v2258, %v2290
    %v2316 = vcombine.low %v2265, %v2297
    %v2317 = vcombine.high %v2265, %v2297
    %v2318 = vcombine.low %v2274, %v2306
    %v2319 = vcombine.high %v2274, %v2306
    %v2320 = vcombine.low %v2281, %v2313
    %v2321 = vcombine.high %v2281, %v2313
    %v2322 = vcombine.low %v1927, %v1935
    %v2323 = vcombine.high %v1927, %v1935
    %v2325 = vunpack.c.l.s4 1983009808
    %v2326 = vunpack.c.0.s8 %v2325
    %v2327 = vlaneseq
    %v2328 = vshrl.u32 %v2327, 7
    %v2329 = vsub.s32 %v2326, %v2328
    %v2330 = vrot.slane %v2322, %v2329
    %v2332 = vunpack.c.l.s4 1983009808
    %v2333 = vunpack.c.0.s8 %v2332
    %v2334 = vlaneseq
    %v2335 = vshrl.u32 %v2334, 7
    %v2336 = vsub.s32 %v2333, %v2335
    %v2337 = vrot.slane %v2323, %v2336
    %v2338 = vcombine.low %v1931, %v1939
    %v2339 = vcombine.high %v1931, %v1939
    %v2341 = vunpack.c.l.s4 1983009808
    %v2342 = vunpack.c.0.s8 %v2341
    %v2343 = vlaneseq
    %v2344 = vshrl.u32 %v2343, 7
    %v2345 = vsub.s32 %v2342, %v2344
    %v2346 = vrot.slane %v2338, %v2345
    %v2348 = vunpack.c.l.s4 1983009808
    %v2349 = vunpack.c.0.s8 %v2348
    %v2350 = vlaneseq
    %v2351 = vshrl.u32 %v2350, 7
    %v2352 = vsub.s32 %v2349, %v2351
    %v2353 = vrot.slane %v2339, %v2352
    %v2354 = vcombine.low %v1951, %v1959
    %v2355 = vcombine.high %v1951, %v1959
    %v2357 = vunpack.c.l.s4 1983009808
    %v2358 = vunpack.c.0.s8 %v2357
    %v2359 = vlaneseq
    %v2360 = vshrl.u32 %v2359, 7
    %v2361 = vsub.s32 %v2358, %v2360
    %v2362 = vrot.slane %v2354, %v2361
    %v2364 = vunpack.c.l.s4 1983009808
    %v2365 = vunpack.c.0.s8 %v2364
    %v2366 = vlaneseq
    %v2367 = vshrl.u32 %v2366, 7
    %v2368 = vsub.s32 %v2365, %v2367
    %v2369 = vrot.slane %v2355, %v2368
    %v2370 = vcombine.low %v1955, %v1963
    %v2371 = vcombine.high %v1955, %v1963
    %v2373 = vunpack.c.l.s4 1983009808
    %v2374 = vunpack.c.0.s8 %v2373
    %v2375 = vlaneseq
    %v2376 = vshrl.u32 %v2375, 7
    %v2377 = vsub.s32 %v2374, %v2376
    %v2378 = vrot.slane %v2370, %v2377
    %v2380 = vunpack.c.l.s4 1983009808
    %v2381 = vunpack.c.0.s8 %v2380
    %v2382 = vlaneseq
    %v2383 = vshrl.u32 %v2382, 7
    %v2384 = vsub.s32 %v2381, %v2383
    %v2385 = vrot.slane %v2371, %v2384
    %v2386 = vcombine.low %v2330, %v2346
    %v2387 = vcombine.high %v2330, %v2346
    %v2389 = vunpack.c.l.s4 1934713408
    %v2390 = vunpack.c.0.s8 %v2389
    %v2391 = vlaneseq
    %v2392 = vshrl.u32 %v2391, 7
    %v2393 = vsub.s32 %v2390, %v2392
    %v2394 = vrot.slane %v2386, %v2393
    %v2396 = vunpack.c.l.s4 1934713408
    %v2397 = vunpack.c.0.s8 %v2396
    %v2398 = vlaneseq
    %v2399 = vshrl.u32 %v2398, 7
    %v2400 = vsub.s32 %v2397, %v2399
    %v2401 = vrot.slane %v2387, %v2400
    %v2402 = vcombine.low %v2337, %v2353
    %v2403 = vcombine.high %v2337, %v2353
    %v2405 = vunpack.c.l.s4 1934713408
    %v2406 = vunpack.c.0.s8 %v2405
    %v2407 = vlaneseq
    %v2408 = vshrl.u32 %v2407, 7
    %v2409 = vsub.s32 %v2406, %v2408
    %v2410 = vrot.slane %v2402, %v2409
    %v2412 = vunpack.c.l.s4 1934713408
    %v2413 = vunpack.c.0.s8 %v2412
    %v2414 = vlaneseq
    %v2415 = vshrl.u32 %v2414, 7
    %v2416 = vsub.s32 %v2413, %v2415
    %v2417 = vrot.slane %v2403, %v2416
    %v2418 = vcombine.low %v2362, %v2378
    %v2419 = vcombine.high %v2362, %v2378
    %v2421 = vunpack.c.l.s4 1934713408
    %v2422 = vunpack.c.0.s8 %v2421
    %v2423 = vlaneseq
    %v2424 = vshrl.u32 %v2423, 7
    %v2425 = vsub.s32 %v2422, %v2424
    %v2426 = vrot.slane %v2418, %v2425
    %v2428 = vunpack.c.l.s4 1934713408
    %v2429 = vunpack.c.0.s8 %v2428
    %v2430 = vlaneseq
    %v2431 = vshrl.u32 %v2430, 7
    %v2432 = vsub.s32 %v2429, %v2431
    %v2433 = vrot.slane %v2419, %v2432
    %v2434 = vcombine.low %v2369, %v2385
    %v2435 = vcombine.high %v2369, %v2385
    %v2437 = vunpack.c.l.s4 1934713408
    %v2438 = vunpack.c.0.s8 %v2437
    %v2439 = vlaneseq
    %v2440 = vshrl.u32 %v2439, 7
    %v2441 = vsub.s32 %v2438, %v2440
    %v2442 = vrot.slane %v2434, %v2441
    %v2444 = vunpack.c.l.s4 1934713408
    %v2445 = vunpack.c.0.s8 %v2444
    %v2446 = vlaneseq
    %v2447 = vshrl.u32 %v2446, 7
    %v2448 = vsub.s32 %v2445, %v2447
    %v2449 = vrot.slane %v2435, %v2448
    %v2450 = vcombine.low %v2394, %v2426
    %v2451 = vcombine.high %v2394, %v2426
    %v2452 = vcombine.low %v2401, %v2433
    %v2453 = vcombine.high %v2401, %v2433
    %v2454 = vcombine.low %v2410, %v2442
    %v2455 = vcombine.high %v2410, %v2442
    %v2456 = vcombine.low %v2417, %v2449
    %v2457 = vcombine.high %v2417, %v2449
    %v2458 = vcombine.low %v1976, %v1986
    %v2459 = vcombine.high %v1976, %v1986
    %v2461 = vunpack.c.l.s4 1983009808
    %v2462 = vunpack.c.0.s8 %v2461
    %v2463 = vlaneseq
    %v2464 = vshrl.u32 %v2463, 7
    %v2465 = vsub.s32 %v2462, %v2464
    %v2466 = vrot.slane %v2458, %v2465
    %v2468 = vunpack.c.l.s4 1983009808
    %v2469 = vunpack.c.0.s8 %v2468
    %v2470 = vlaneseq
    %v2471 = vshrl.u32 %v2470, 7
    %v2472 = vsub.s32 %v2469, %v2471
    %v2473 = vrot.slane %v2459, %v2472
    %v2474 = vcombine.low %v1981, %v1991
    %v2475 = vcombine.high %v1981, %v1991
    %v2477 = vunpack.c.l.s4 1983009808
    %v2478 = vunpack.c.0.s8 %v2477
    %v2479 = vlaneseq
    %v2480 = vshrl.u32 %v2479, 7
    %v2481 = vsub.s32 %v2478, %v2480
    %v2482 = vrot.slane %v2474, %v2481
    %v2484 = vunpack.c.l.s4 1983009808
    %v2485 = vunpack.c.0.s8 %v2484
    %v2486 = vlaneseq
    %v2487 = vshrl.u32 %v2486, 7
    %v2488 = vsub.s32 %v2485, %v2487
    %v2489 = vrot.slane %v2475, %v2488
    %v2490 = vcombine.low %v2003, %v2011
    %v2491 = vcombine.high %v2003, %v2011
    %v2493 = vunpack.c.l.s4 1983009808
    %v2494 = vunpack.c.0.s8 %v2493
    %v2495 = vlaneseq
    %v2496 = vshrl.u32 %v2495, 7
    %v2497 = vsub.s32 %v2494, %v2496
    %v2498 = vrot.slane %v2490, %v2497
    %v2500 = vunpack.c.l.s4 1983009808
    %v2501 = vunpack.c.0.s8 %v2500
    %v2502 = vlaneseq
    %v2503 = vshrl.u32 %v2502, 7
    %v2504 = vsub.s32 %v2501, %v2503
    %v2505 = vrot.slane %v2491, %v2504
    %v2506 = vcombine.low %v2007, %v2015
    %v2507 = vcombine.high %v2007, %v2015
    %v2509 = vunpack.c.l.s4 1983009808
    %v2510 = vunpack.c.0.s8 %v2509
    %v2511 = vlaneseq
    %v2512 = vshrl.u32 %v2511, 7
    %v2513 = vsub.s32 %v2510, %v2512
    %v2514 = vrot.slane %v2506, %v2513
    %v2516 = vunpack.c.l.s4 1983009808
    %v2517 = vunpack.c.0.s8 %v2516
    %v2518 = vlaneseq
    %v2519 = vshrl.u32 %v2518, 7
    %v2520 = vsub.s32 %v2517, %v2519
    %v2521 = vrot.slane %v2507, %v2520
    %v2522 = vcombine.low %v2466, %v2482
    %v2523 = vcombine.high %v2466, %v2482
    %v2525 = vunpack.c.l.s4 1934713408
    %v2526 = vunpack.c.0.s8 %v2525
    %v2527 = vlaneseq
    %v2528 = vshrl.u32 %v2527, 7
    %v2529 = vsub.s32 %v2526, %v2528
    %v2530 = vrot.slane %v2522, %v2529
    %v2532 = vunpack.c.l.s4 1934713408
    %v2533 = vunpack.c.0.s8 %v2532
    %v2534 = vlaneseq
    %v2535 = vshrl.u32 %v2534, 7
    %v2536 = vsub.s32 %v2533, %v2535
    %v2537 = vrot.slane %v2523, %v2536
    %v2538 = vcombine.low %v2473, %v2489
    %v2539 = vcombine.high %v2473, %v2489
    %v2541 = vunpack.c.l.s4 1934713408
    %v2542 = vunpack.c.0.s8 %v2541
    %v2543 = vlaneseq
    %v2544 = vshrl.u32 %v2543, 7
    %v2545 = vsub.s32 %v2542, %v2544
    %v2546 = vrot.slane %v2538, %v2545
    %v2548 = vunpack.c.l.s4 1934713408
    %v2549 = vunpack.c.0.s8 %v2548
    %v2550 = vlaneseq
    %v2551 = vshrl.u32 %v2550, 7
    %v2552 = vsub.s32 %v2549, %v2551
    %v2553 = vrot.slane %v2539, %v2552
    %v2554 = vcombine.low %v2498, %v2514
    %v2555 = vcombine.high %v2498, %v2514
    %v2557 = vunpack.c.l.s4 1934713408
    %v2558 = vunpack.c.0.s8 %v2557
    %v2559 = vlaneseq
    %v2560 = vshrl.u32 %v2559, 7
    %v2561 = vsub.s32 %v2558, %v2560
    %v2562 = vrot.slane %v2554, %v2561
    %v2564 = vunpack.c.l.s4 1934713408
    %v2565 = vunpack.c.0.s8 %v2564
    %v2566 = vlaneseq
    %v2567 = vshrl.u32 %v2566, 7
    %v2568 = vsub.s32 %v2565, %v2567
    %v2569 = vrot.slane %v2555, %v2568
    %v2570 = vcombine.low %v2505, %v2521
    %v2571 = vcombine.high %v2505, %v2521
    %v2573 = vunpack.c.l.s4 1934713408
    %v2574 = vunpack.c.0.s8 %v2573
    %v2575 = vlaneseq
    %v2576 = vshrl.u32 %v2575, 7
    %v2577 = vsub.s32 %v2574, %v2576
    %v2578 = vrot.slane %v2570, %v2577
    %v2580 = vunpack.c.l.s4 1934713408
    %v2581 = vunpack.c.0.s8 %v2580
    %v2582 = vlaneseq
    %v2583 = vshrl.u32 %v2582, 7
    %v2584 = vsub.s32 %v2581, %v2583
    %v2585 = vrot.slane %v2571, %v2584
    %v2586 = vcombine.low %v2530, %v2562
    %v2587 = vcombine.high %v2530, %v2562
    %v2588 = vcombine.low %v2537, %v2569
    %v2589 = vcombine.high %v2537, %v2569
    %v2590 = vcombine.low %v2546, %v2578
    %v2591 = vcombine.high %v2546, %v2578
    %v2592 = vcombine.low %v2553, %v2585
    %v2593 = vcombine.high %v2553, %v2585
    %v2594 = vcombine.low %v2027, %v2035
    %v2595 = vcombine.high %v2027, %v2035
    %v2597 = vunpack.c.l.s4 1983009808
    %v2598 = vunpack.c.0.s8 %v2597
    %v2599 = vlaneseq
    %v2600 = vshrl.u32 %v2599, 7
    %v2601 = vsub.s32 %v2598, %v2600
    %v2602 = vrot.slane %v2594, %v2601
    %v2604 = vunpack.c.l.s4 1983009808
    %v2605 = vunpack.c.0.s8 %v2604
    %v2606 = vlaneseq
    %v2607 = vshrl.u32 %v2606, 7
    %v2608 = vsub.s32 %v2605, %v2607
    %v2609 = vrot.slane %v2595, %v2608
    %v2610 = vcombine.low %v2031, %v2039
    %v2611 = vcombine.high %v2031, %v2039
    %v2613 = vunpack.c.l.s4 1983009808
    %v2614 = vunpack.c.0.s8 %v2613
    %v2615 = vlaneseq
    %v2616 = vshrl.u32 %v2615, 7
    %v2617 = vsub.s32 %v2614, %v2616
    %v2618 = vrot.slane %v2610, %v2617
    %v2620 = vunpack.c.l.s4 1983009808
    %v2621 = vunpack.c.0.s8 %v2620
    %v2622 = vlaneseq
    %v2623 = vshrl.u32 %v2622, 7
    %v2624 = vsub.s32 %v2621, %v2623
    %v2625 = vrot.slane %v2611, %v2624
    %v2626 = vcombine.low %v2602, %v2618
    %v2627 = vcombine.high %v2602, %v2618
    %v2629 = vunpack.c.l.s4 1934713408
    %v2630 = vunpack.c.0.s8 %v2629
    %v2631 = vlaneseq
    %v2632 = vshrl.u32 %v2631, 7
    %v2633 = vsub.s32 %v2630, %v2632
    %v2634 = vrot.slane %v2626, %v2633
    %v2636 = vunpack.c.l.s4 1934713408
    %v2637 = vunpack.c.0.s8 %v2636
    %v2638 = vlaneseq
    %v2639 = vshrl.u32 %v2638, 7
    %v2640 = vsub.s32 %v2637, %v2639
    %v2641 = vrot.slane %v2627, %v2640
    %v2642 = vcombine.low %v2609, %v2625
    %v2643 = vcombine.high %v2609, %v2625
    %v2645 = vunpack.c.l.s4 1934713408
    %v2646 = vunpack.c.0.s8 %v2645
    %v2647 = vlaneseq
    %v2648 = vshrl.u32 %v2647, 7
    %v2649 = vsub.s32 %v2646, %v2648
    %v2650 = vrot.slane %v2642, %v2649
    %v2652 = vunpack.c.l.s4 1934713408
    %v2653 = vunpack.c.0.s8 %v2652
    %v2654 = vlaneseq
    %v2655 = vshrl.u32 %v2654, 7
    %v2656 = vsub.s32 %v2653, %v2655
    %v2657 = vrot.slane %v2643, %v2656
    %v2658 = vcombine.high %v2634, 0.0
    %v2659 = vcombine.high %v2641, 0.0
    %v2660 = vcombine.high %v2650, 0.0
    %v2661 = vcombine.high %v2657, 0.0
    %v2662 = vcombine.low %v1827, %v1833
    %v2663 = vcombine.high %v1827, %v1833
    %v2665 = vunpack.c.l.s4 1983009808
    %v2666 = vunpack.c.0.s8 %v2665
    %v2667 = vlaneseq
    %v2668 = vshrl.u32 %v2667, 7
    %v2669 = vsub.s32 %v2666, %v2668
    %v2670 = vrot.slane %v2662, %v2669
    %v2672 = vunpack.c.l.s4 1983009808
    %v2673 = vunpack.c.0.s8 %v2672
    %v2674 = vlaneseq
    %v2675 = vshrl.u32 %v2674, 7
    %v2676 = vsub.s32 %v2673, %v2675
    %v2677 = vrot.slane %v2663, %v2676
    %v2678 = vcombine.low %v1830, %v1836
    %v2679 = vcombine.high %v1830, %v1836
    %v2681 = vunpack.c.l.s4 1983009808
    %v2682 = vunpack.c.0.s8 %v2681
    %v2683 = vlaneseq
    %v2684 = vshrl.u32 %v2683, 7
    %v2685 = vsub.s32 %v2682, %v2684
    %v2686 = vrot.slane %v2678, %v2685
    %v2688 = vunpack.c.l.s4 1983009808
    %v2689 = vunpack.c.0.s8 %v2688
    %v2690 = vlaneseq
    %v2691 = vshrl.u32 %v2690, 7
    %v2692 = vsub.s32 %v2689, %v2691
    %v2693 = vrot.slane %v2679, %v2692
    %v2694 = vcombine.low %v1849, %v1857
    %v2695 = vcombine.high %v1849, %v1857
    %v2697 = vunpack.c.l.s4 1983009808
    %v2698 = vunpack.c.0.s8 %v2697
    %v2699 = vlaneseq
    %v2700 = vshrl.u32 %v2699, 7
    %v2701 = vsub.s32 %v2698, %v2700
    %v2702 = vrot.slane %v2694, %v2701
    %v2704 = vunpack.c.l.s4 1983009808
    %v2705 = vunpack.c.0.s8 %v2704
    %v2706 = vlaneseq
    %v2707 = vshrl.u32 %v2706, 7
    %v2708 = vsub.s32 %v2705, %v2707
    %v2709 = vrot.slane %v2695, %v2708
    %v2710 = vcombine.low %v1853, %v1861
    %v2711 = vcombine.high %v1853, %v1861
    %v2713 = vunpack.c.l.s4 1983009808
    %v2714 = vunpack.c.0.s8 %v2713
    %v2715 = vlaneseq
    %v2716 = vshrl.u32 %v2715, 7
    %v2717 = vsub.s32 %v2714, %v2716
    %v2718 = vrot.slane %v2710, %v2717
    %v2720 = vunpack.c.l.s4 1983009808
    %v2721 = vunpack.c.0.s8 %v2720
    %v2722 = vlaneseq
    %v2723 = vshrl.u32 %v2722, 7
    %v2724 = vsub.s32 %v2721, %v2723
    %v2725 = vrot.slane %v2711, %v2724
    %v2726 = vcombine.low %v2670, %v2686
    %v2727 = vcombine.high %v2670, %v2686
    %v2729 = vunpack.c.l.s4 1934713408
    %v2730 = vunpack.c.0.s8 %v2729
    %v2731 = vlaneseq
    %v2732 = vshrl.u32 %v2731, 7
    %v2733 = vsub.s32 %v2730, %v2732
    %v2734 = vrot.slane %v2726, %v2733
    %v2736 = vunpack.c.l.s4 1934713408
    %v2737 = vunpack.c.0.s8 %v2736
    %v2738 = vlaneseq
    %v2739 = vshrl.u32 %v2738, 7
    %v2740 = vsub.s32 %v2737, %v2739
    %v2741 = vrot.slane %v2727, %v2740
    %v2742 = vcombine.low %v2677, %v2693
    %v2743 = vcombine.high %v2677, %v2693
    %v2745 = vunpack.c.l.s4 1934713408
    %v2746 = vunpack.c.0.s8 %v2745
    %v2747 = vlaneseq
    %v2748 = vshrl.u32 %v2747, 7
    %v2749 = vsub.s32 %v2746, %v2748
    %v2750 = vrot.slane %v2742, %v2749
    %v2752 = vunpack.c.l.s4 1934713408
    %v2753 = vunpack.c.0.s8 %v2752
    %v2754 = vlaneseq
    %v2755 = vshrl.u32 %v2754, 7
    %v2756 = vsub.s32 %v2753, %v2755
    %v2757 = vrot.slane %v2743, %v2756
    %v2758 = vcombine.low %v2702, %v2718
    %v2759 = vcombine.high %v2702, %v2718
    %v2761 = vunpack.c.l.s4 1934713408
    %v2762 = vunpack.c.0.s8 %v2761
    %v2763 = vlaneseq
    %v2764 = vshrl.u32 %v2763, 7
    %v2765 = vsub.s32 %v2762, %v2764
    %v2766 = vrot.slane %v2758, %v2765
    %v2768 = vunpack.c.l.s4 1934713408
    %v2769 = vunpack.c.0.s8 %v2768
    %v2770 = vlaneseq
    %v2771 = vshrl.u32 %v2770, 7
    %v2772 = vsub.s32 %v2769, %v2771
    %v2773 = vrot.slane %v2759, %v2772
    %v2774 = vcombine.low %v2709, %v2725
    %v2775 = vcombine.high %v2709, %v2725
    %v2777 = vunpack.c.l.s4 1934713408
    %v2778 = vunpack.c.0.s8 %v2777
    %v2779 = vlaneseq
    %v2780 = vshrl.u32 %v2779, 7
    %v2781 = vsub.s32 %v2778, %v2780
    %v2782 = vrot.slane %v2774, %v2781
    %v2784 = vunpack.c.l.s4 1934713408
    %v2785 = vunpack.c.0.s8 %v2784
    %v2786 = vlaneseq
    %v2787 = vshrl.u32 %v2786, 7
    %v2788 = vsub.s32 %v2785, %v2787
    %v2789 = vrot.slane %v2775, %v2788
    %v2790 = vcombine.low %v2734, %v2766
    %v2791 = vcombine.high %v2734, %v2766
    %v2792 = vcombine.low %v2741, %v2773
    %v2793 = vcombine.high %v2741, %v2773
    %v2794 = vcombine.low %v2750, %v2782
    %v2795 = vcombine.high %v2750, %v2782
    %v2796 = vcombine.low %v2757, %v2789
    %v2797 = vcombine.high %v2757, %v2789
    %v2798 = vcombine.low %v1873, %v1881
    %v2799 = vcombine.high %v1873, %v1881
    %v2801 = vunpack.c.l.s4 1983009808
    %v2802 = vunpack.c.0.s8 %v2801
    %v2803 = vlaneseq
    %v2804 = vshrl.u32 %v2803, 7
    %v2805 = vsub.s32 %v2802, %v2804
    %v2806 = vrot.slane %v2798, %v2805
    %v2808 = vunpack.c.l.s4 1983009808
    %v2809 = vunpack.c.0.s8 %v2808
    %v2810 = vlaneseq
    %v2811 = vshrl.u32 %v2810, 7
    %v2812 = vsub.s32 %v2809, %v2811
    %v2813 = vrot.slane %v2799, %v2812
    %v2814 = vcombine.low %v1877, %v1885
    %v2815 = vcombine.high %v1877, %v1885
    %v2817 = vunpack.c.l.s4 1983009808
    %v2818 = vunpack.c.0.s8 %v2817
    %v2819 = vlaneseq
    %v2820 = vshrl.u32 %v2819, 7
    %v2821 = vsub.s32 %v2818, %v2820
    %v2822 = vrot.slane %v2814, %v2821
    %v2824 = vunpack.c.l.s4 1983009808
    %v2825 = vunpack.c.0.s8 %v2824
    %v2826 = vlaneseq
    %v2827 = vshrl.u32 %v2826, 7
    %v2828 = vsub.s32 %v2825, %v2827
    %v2829 = vrot.slane %v2815, %v2828
    %v2830 = vcombine.low %v1902, %v1912
    %v2831 = vcombine.high %v1902, %v1912
    %v2833 = vunpack.c.l.s4 1983009808
    %v2834 = vunpack.c.0.s8 %v2833
    %v2835 = vlaneseq
    %v2836 = vshrl.u32 %v2835, 7
    %v2837 = vsub.s32 %v2834, %v2836
    %v2838 = vrot.slane %v2830, %v2837
    %v2840 = vunpack.c.l.s4 1983009808
    %v2841 = vunpack.c.0.s8 %v2840
    %v2842 = vlaneseq
    %v2843 = vshrl.u32 %v2842, 7
    %v2844 = vsub.s32 %v2841, %v2843
    %v2845 = vrot.slane %v2831, %v2844
    %v2846 = vcombine.low %v1907, %v1917
    %v2847 = vcombine.high %v1907, %v1917
    %v2849 = vunpack.c.l.s4 1983009808
    %v2850 = vunpack.c.0.s8 %v2849
    %v2851 = vlaneseq
    %v2852 = vshrl.u32 %v2851, 7
    %v2853 = vsub.s32 %v2850, %v2852
    %v2854 = vrot.slane %v2846, %v2853
    %v2856 = vunpack.c.l.s4 1983009808
    %v2857 = vunpack.c.0.s8 %v2856
    %v2858 = vlaneseq
    %v2859 = vshrl.u32 %v2858, 7
    %v2860 = vsub.s32 %v2857, %v2859
    %v2861 = vrot.slane %v2847, %v2860
    %v2862 = vcombine.low %v2806, %v2822
    %v2863 = vcombine.high %v2806, %v2822
    %v2865 = vunpack.c.l.s4 1934713408
    %v2866 = vunpack.c.0.s8 %v2865
    %v2867 = vlaneseq
    %v2868 = vshrl.u32 %v2867, 7
    %v2869 = vsub.s32 %v2866, %v2868
    %v2870 = vrot.slane %v2862, %v2869
    %v2872 = vunpack.c.l.s4 1934713408
    %v2873 = vunpack.c.0.s8 %v2872
    %v2874 = vlaneseq
    %v2875 = vshrl.u32 %v2874, 7
    %v2876 = vsub.s32 %v2873, %v2875
    %v2877 = vrot.slane %v2863, %v2876
    %v2878 = vcombine.low %v2813, %v2829
    %v2879 = vcombine.high %v2813, %v2829
    %v2881 = vunpack.c.l.s4 1934713408
    %v2882 = vunpack.c.0.s8 %v2881
    %v2883 = vlaneseq
    %v2884 = vshrl.u32 %v2883, 7
    %v2885 = vsub.s32 %v2882, %v2884
    %v2886 = vrot.slane %v2878, %v2885
    %v2888 = vunpack.c.l.s4 1934713408
    %v2889 = vunpack.c.0.s8 %v2888
    %v2890 = vlaneseq
    %v2891 = vshrl.u32 %v2890, 7
    %v2892 = vsub.s32 %v2889, %v2891
    %v2893 = vrot.slane %v2879, %v2892
    %v2894 = vcombine.low %v2838, %v2854
    %v2895 = vcombine.high %v2838, %v2854
    %v2897 = vunpack.c.l.s4 1934713408
    %v2898 = vunpack.c.0.s8 %v2897
    %v2899 = vlaneseq
    %v2900 = vshrl.u32 %v2899, 7
    %v2901 = vsub.s32 %v2898, %v2900
    %v2902 = vrot.slane %v2894, %v2901
    %v2904 = vunpack.c.l.s4 1934713408
    %v2905 = vunpack.c.0.s8 %v2904
    %v2906 = vlaneseq
    %v2907 = vshrl.u32 %v2906, 7
    %v2908 = vsub.s32 %v2905, %v2907
    %v2909 = vrot.slane %v2895, %v2908
    %v2910 = vcombine.low %v2845, %v2861
    %v2911 = vcombine.high %v2845, %v2861
    %v2913 = vunpack.c.l.s4 1934713408
    %v2914 = vunpack.c.0.s8 %v2913
    %v2915 = vlaneseq
    %v2916 = vshrl.u32 %v2915, 7
    %v2917 = vsub.s32 %v2914, %v2916
    %v2918 = vrot.slane %v2910, %v2917
    %v2920 = vunpack.c.l.s4 1934713408
    %v2921 = vunpack.c.0.s8 %v2920
    %v2922 = vlaneseq
    %v2923 = vshrl.u32 %v2922, 7
    %v2924 = vsub.s32 %v2921, %v2923
    %v2925 = vrot.slane %v2911, %v2924
    %v2926 = vcombine.low %v2870, %v2902
    %v2927 = vcombine.high %v2870, %v2902
    %v2928 = vcombine.low %v2877, %v2909
    %v2929 = vcombine.high %v2877, %v2909
    %v2930 = vcombine.low %v2886, %v2918
    %v2931 = vcombine.high %v2886, %v2918
    %v2932 = vcombine.low %v2893, %v2925
    %v2933 = vcombine.high %v2893, %v2925
    %v2934 = vcombine.low %v1929, %v1937
    %v2935 = vcombine.high %v1929, %v1937
    %v2937 = vunpack.c.l.s4 1983009808
    %v2938 = vunpack.c.0.s8 %v2937
    %v2939 = vlaneseq
    %v2940 = vshrl.u32 %v2939, 7
    %v2941 = vsub.s32 %v2938, %v2940
    %v2942 = vrot.slane %v2934, %v2941
    %v2944 = vunpack.c.l.s4 1983009808
    %v2945 = vunpack.c.0.s8 %v2944
    %v2946 = vlaneseq
    %v2947 = vshrl.u32 %v2946, 7
    %v2948 = vsub.s32 %v2945, %v2947
    %v2949 = vrot.slane %v2935, %v2948
    %v2950 = vcombine.low %v1933, %v1941
    %v2951 = vcombine.high %v1933, %v1941
    %v2953 = vunpack.c.l.s4 1983009808
    %v2954 = vunpack.c.0.s8 %v2953
    %v2955 = vlaneseq
    %v2956 = vshrl.u32 %v2955, 7
    %v2957 = vsub.s32 %v2954, %v2956
    %v2958 = vrot.slane %v2950, %v2957
    %v2960 = vunpack.c.l.s4 1983009808
    %v2961 = vunpack.c.0.s8 %v2960
    %v2962 = vlaneseq
    %v2963 = vshrl.u32 %v2962, 7
    %v2964 = vsub.s32 %v2961, %v2963
    %v2965 = vrot.slane %v2951, %v2964
    %v2966 = vcombine.low %v1953, %v1961
    %v2967 = vcombine.high %v1953, %v1961
    %v2969 = vunpack.c.l.s4 1983009808
    %v2970 = vunpack.c.0.s8 %v2969
    %v2971 = vlaneseq
    %v2972 = vshrl.u32 %v2971, 7
    %v2973 = vsub.s32 %v2970, %v2972
    %v2974 = vrot.slane %v2966, %v2973
    %v2976 = vunpack.c.l.s4 1983009808
    %v2977 = vunpack.c.0.s8 %v2976
    %v2978 = vlaneseq
    %v2979 = vshrl.u32 %v2978, 7
    %v2980 = vsub.s32 %v2977, %v2979
    %v2981 = vrot.slane %v2967, %v2980
    %v2982 = vcombine.low %v1957, %v1965
    %v2983 = vcombine.high %v1957, %v1965
    %v2985 = vunpack.c.l.s4 1983009808
    %v2986 = vunpack.c.0.s8 %v2985
    %v2987 = vlaneseq
    %v2988 = vshrl.u32 %v2987, 7
    %v2989 = vsub.s32 %v2986, %v2988
    %v2990 = vrot.slane %v2982, %v2989
    %v2992 = vunpack.c.l.s4 1983009808
    %v2993 = vunpack.c.0.s8 %v2992
    %v2994 = vlaneseq
    %v2995 = vshrl.u32 %v2994, 7
    %v2996 = vsub.s32 %v2993, %v2995
    %v2997 = vrot.slane %v2983, %v2996
    %v2998 = vcombine.low %v2942, %v2958
    %v2999 = vcombine.high %v2942, %v2958
    %v3001 = vunpack.c.l.s4 1934713408
    %v3002 = vunpack.c.0.s8 %v3001
    %v3003 = vlaneseq
    %v3004 = vshrl.u32 %v3003, 7
    %v3005 = vsub.s32 %v3002, %v3004
    %v3006 = vrot.slane %v2998, %v3005
    %v3008 = vunpack.c.l.s4 1934713408
    %v3009 = vunpack.c.0.s8 %v3008
    %v3010 = vlaneseq
    %v3011 = vshrl.u32 %v3010, 7
    %v3012 = vsub.s32 %v3009, %v3011
    %v3013 = vrot.slane %v2999, %v3012
    %v3014 = vcombine.low %v2949, %v2965
    %v3015 = vcombine.high %v2949, %v2965
    %v3017 = vunpack.c.l.s4 1934713408
    %v3018 = vunpack.c.0.s8 %v3017
    %v3019 = vlaneseq
    %v3020 = vshrl.u32 %v3019, 7
    %v3021 = vsub.s32 %v3018, %v3020
    %v3022 = vrot.slane %v3014, %v3021
    %v3024 = vunpack.c.l.s4 1934713408
    %v3025 = vunpack.c.0.s8 %v3024
    %v3026 = vlaneseq
    %v3027 = vshrl.u32 %v3026, 7
    %v3028 = vsub.s32 %v3025, %v3027
    %v3029 = vrot.slane %v3015, %v3028
    %v3030 = vcombine.low %v2974, %v2990
    %v3031 = vcombine.high %v2974, %v2990
    %v3033 = vunpack.c.l.s4 1934713408
    %v3034 = vunpack.c.0.s8 %v3033
    %v3035 = vlaneseq
    %v3036 = vshrl.u32 %v3035, 7
    %v3037 = vsub.s32 %v3034, %v3036
    %v3038 = vrot.slane %v3030, %v3037
    %v3040 = vunpack.c.l.s4 1934713408
    %v3041 = vunpack.c.0.s8 %v3040
    %v3042 = vlaneseq
    %v3043 = vshrl.u32 %v3042, 7
    %v3044 = vsub.s32 %v3041, %v3043
    %v3045 = vrot.slane %v3031, %v3044
    %v3046 = vcombine.low %v2981, %v2997
    %v3047 = vcombine.high %v2981, %v2997
    %v3049 = vunpack.c.l.s4 1934713408
    %v3050 = vunpack.c.0.s8 %v3049
    %v3051 = vlaneseq
    %v3052 = vshrl.u32 %v3051, 7
    %v3053 = vsub.s32 %v3050, %v3052
    %v3054 = vrot.slane %v3046, %v3053
    %v3056 = vunpack.c.l.s4 1934713408
    %v3057 = vunpack.c.0.s8 %v3056
    %v3058 = vlaneseq
    %v3059 = vshrl.u32 %v3058, 7
    %v3060 = vsub.s32 %v3057, %v3059
    %v3061 = vrot.slane %v3047, %v3060
    %v3062 = vcombine.low %v3006, %v3038
    %v3063 = vcombine.high %v3006, %v3038
    %v3064 = vcombine.low %v3013, %v3045
    %v3065 = vcombine.high %v3013, %v3045
    %v3066 = vcombine.low %v3022, %v3054
    %v3067 = vcombine.high %v3022, %v3054
    %v3068 = vcombine.low %v3029, %v3061
    %v3069 = vcombine.high %v3029, %v3061
    %v3070 = vcombine.low %v1978, %v1988
    %v3071 = vcombine.high %v1978, %v1988
    %v3073 = vunpack.c.l.s4 1983009808
    %v3074 = vunpack.c.0.s8 %v3073
    %v3075 = vlaneseq
    %v3076 = vshrl.u32 %v3075, 7
    %v3077 = vsub.s32 %v3074, %v3076
    %v3078 = vrot.slane %v3070, %v3077
    %v3080 = vunpack.c.l.s4 1983009808
    %v3081 = vunpack.c.0.s8 %v3080
    %v3082 = vlaneseq
    %v3083 = vshrl.u32 %v3082, 7
    %v3084 = vsub.s32 %v3081, %v3083
    %v3085 = vrot.slane %v3071, %v3084
    %v3086 = vcombine.low %v1983, %v1993
    %v3087 = vcombine.high %v1983, %v1993
    %v3089 = vunpack.c.l.s4 1983009808
    %v3090 = vunpack.c.0.s8 %v3089
    %v3091 = vlaneseq
    %v3092 = vshrl.u32 %v3091, 7
    %v3093 = vsub.s32 %v3090, %v3092
    %v3094 = vrot.slane %v3086, %v3093
    %v3096 = vunpack.c.l.s4 1983009808
    %v3097 = vunpack.c.0.s8 %v3096
    %v3098 = vlaneseq
    %v3099 = vshrl.u32 %v3098, 7
    %v3100 = vsub.s32 %v3097, %v3099
    %v3101 = vrot.slane %v3087, %v3100
    %v3102 = vcombine.low %v2005, %v2013
    %v3103 = vcombine.high %v2005, %v2013
    %v3105 = vunpack.c.l.s4 1983009808
    %v3106 = vunpack.c.0.s8 %v3105
    %v3107 = vlaneseq
    %v3108 = vshrl.u32 %v3107, 7
    %v3109 = vsub.s32 %v3106, %v3108
    %v3110 = vrot.slane %v3102, %v3109
    %v3112 = vunpack.c.l.s4 1983009808
    %v3113 = vunpack.c.0.s8 %v3112
    %v3114 = vlaneseq
    %v3115 = vshrl.u32 %v3114, 7
    %v3116 = vsub.s32 %v3113, %v3115
    %v3117 = vrot.slane %v3103, %v3116
    %v3118 = vcombine.low %v2009, %v2017
    %v3119 = vcombine.high %v2009, %v2017
    %v3121 = vunpack.c.l.s4 1983009808
    %v3122 = vunpack.c.0.s8 %v3121
    %v3123 = vlaneseq
    %v3124 = vshrl.u32 %v3123, 7
    %v3125 = vsub.s32 %v3122, %v3124
    %v3126 = vrot.slane %v3118, %v3125
    %v3128 = vunpack.c.l.s4 1983009808
    %v3129 = vunpack.c.0.s8 %v3128
    %v3130 = vlaneseq
    %v3131 = vshrl.u32 %v3130, 7
    %v3132 = vsub.s32 %v3129, %v3131
    %v3133 = vrot.slane %v3119, %v3132
    %v3134 = vcombine.low %v3078, %v3094
    %v3135 = vcombine.high %v3078, %v3094
    %v3137 = vunpack.c.l.s4 1934713408
    %v3138 = vunpack.c.0.s8 %v3137
    %v3139 = vlaneseq
    %v3140 = vshrl.u32 %v3139, 7
    %v3141 = vsub.s32 %v3138, %v3140
    %v3142 = vrot.slane %v3134, %v3141
    %v3144 = vunpack.c.l.s4 1934713408
    %v3145 = vunpack.c.0.s8 %v3144
    %v3146 = vlaneseq
    %v3147 = vshrl.u32 %v3146, 7
    %v3148 = vsub.s32 %v3145, %v3147
    %v3149 = vrot.slane %v3135, %v3148
    %v3150 = vcombine.low %v3085, %v3101
    %v3151 = vcombine.high %v3085, %v3101
    %v3153 = vunpack.c.l.s4 1934713408
    %v3154 = vunpack.c.0.s8 %v3153
    %v3155 = vlaneseq
    %v3156 = vshrl.u32 %v3155, 7
    %v3157 = vsub.s32 %v3154, %v3156
    %v3158 = vrot.slane %v3150, %v3157
    %v3160 = vunpack.c.l.s4 1934713408
    %v3161 = vunpack.c.0.s8 %v3160
    %v3162 = vlaneseq
    %v3163 = vshrl.u32 %v3162, 7
    %v3164 = vsub.s32 %v3161, %v3163
    %v3165 = vrot.slane %v3151, %v3164
    %v3166 = vcombine.low %v3110, %v3126
    %v3167 = vcombine.high %v3110, %v3126
    %v3169 = vunpack.c.l.s4 1934713408
    %v3170 = vunpack.c.0.s8 %v3169
    %v3171 = vlaneseq
    %v3172 = vshrl.u32 %v3171, 7
    %v3173 = vsub.s32 %v3170, %v3172
    %v3174 = vrot.slane %v3166, %v3173
    %v3176 = vunpack.c.l.s4 1934713408
    %v3177 = vunpack.c.0.s8 %v3176
    %v3178 = vlaneseq
    %v3179 = vshrl.u32 %v3178, 7
    %v3180 = vsub.s32 %v3177, %v3179
    %v3181 = vrot.slane %v3167, %v3180
    %v3182 = vcombine.low %v3117, %v3133
    %v3183 = vcombine.high %v3117, %v3133
    %v3185 = vunpack.c.l.s4 1934713408
    %v3186 = vunpack.c.0.s8 %v3185
    %v3187 = vlaneseq
    %v3188 = vshrl.u32 %v3187, 7
    %v3189 = vsub.s32 %v3186, %v3188
    %v3190 = vrot.slane %v3182, %v3189
    %v3192 = vunpack.c.l.s4 1934713408
    %v3193 = vunpack.c.0.s8 %v3192
    %v3194 = vlaneseq
    %v3195 = vshrl.u32 %v3194, 7
    %v3196 = vsub.s32 %v3193, %v3195
    %v3197 = vrot.slane %v3183, %v3196
    %v3198 = vcombine.low %v3142, %v3174
    %v3199 = vcombine.high %v3142, %v3174
    %v3200 = vcombine.low %v3149, %v3181
    %v3201 = vcombine.high %v3149, %v3181
    %v3202 = vcombine.low %v3158, %v3190
    %v3203 = vcombine.high %v3158, %v3190
    %v3204 = vcombine.low %v3165, %v3197
    %v3205 = vcombine.high %v3165, %v3197
    %v3206 = vcombine.low %v2029, %v2037
    %v3207 = vcombine.high %v2029, %v2037
    %v3209 = vunpack.c.l.s4 1983009808
    %v3210 = vunpack.c.0.s8 %v3209
    %v3211 = vlaneseq
    %v3212 = vshrl.u32 %v3211, 7
    %v3213 = vsub.s32 %v3210, %v3212
    %v3214 = vrot.slane %v3206, %v3213
    %v3216 = vunpack.c.l.s4 1983009808
    %v3217 = vunpack.c.0.s8 %v3216
    %v3218 = vlaneseq
    %v3219 = vshrl.u32 %v3218, 7
    %v3220 = vsub.s32 %v3217, %v3219
    %v3221 = vrot.slane %v3207, %v3220
    %v3222 = vcombine.low %v2033, %v2041
    %v3223 = vcombine.high %v2033, %v2041
    %v3225 = vunpack.c.l.s4 1983009808
    %v3226 = vunpack.c.0.s8 %v3225
    %v3227 = vlaneseq
    %v3228 = vshrl.u32 %v3227, 7
    %v3229 = vsub.s32 %v3226, %v3228
    %v3230 = vrot.slane %v3222, %v3229
    %v3232 = vunpack.c.l.s4 1983009808
    %v3233 = vunpack.c.0.s8 %v3232
    %v3234 = vlaneseq
    %v3235 = vshrl.u32 %v3234, 7
    %v3236 = vsub.s32 %v3233, %v3235
    %v3237 = vrot.slane %v3223, %v3236
    %v3238 = vcombine.low %v3214, %v3230
    %v3239 = vcombine.high %v3214, %v3230
    %v3241 = vunpack.c.l.s4 1934713408
    %v3242 = vunpack.c.0.s8 %v3241
    %v3243 = vlaneseq
    %v3244 = vshrl.u32 %v3243, 7
    %v3245 = vsub.s32 %v3242, %v3244
    %v3246 = vrot.slane %v3238, %v3245
    %v3248 = vunpack.c.l.s4 1934713408
    %v3249 = vunpack.c.0.s8 %v3248
    %v3250 = vlaneseq
    %v3251 = vshrl.u32 %v3250, 7
    %v3252 = vsub.s32 %v3249, %v3251
    %v3253 = vrot.slane %v3239, %v3252
    %v3254 = vcombine.low %v3221, %v3237
    %v3255 = vcombine.high %v3221, %v3237
    %v3257 = vunpack.c.l.s4 1934713408
    %v3258 = vunpack.c.0.s8 %v3257
    %v3259 = vlaneseq
    %v3260 = vshrl.u32 %v3259, 7
    %v3261 = vsub.s32 %v3258, %v3260
    %v3262 = vrot.slane %v3254, %v3261
    %v3264 = vunpack.c.l.s4 1934713408
    %v3265 = vunpack.c.0.s8 %v3264
    %v3266 = vlaneseq
    %v3267 = vshrl.u32 %v3266, 7
    %v3268 = vsub.s32 %v3265, %v3267
    %v3269 = vrot.slane %v3255, %v3268
    %v3270 = vcombine.high %v3246, 0.0
    %v3271 = vcombine.high %v3253, 0.0
    %v3272 = vcombine.high %v3262, 0.0
    %v3273 = vcombine.high %v3269, 0.0
    %3279 = vrot.lane.b32.xlu0 %v2179, 16
    %v3280 = vpop.permute.xlu0 %3279
    %3281 = vrot.lane.b32.xlu0 %v2315, 16
    %v3282 = vpop.permute.xlu0 %3281
    %3283 = vrot.lane.b32.xlu0 %v2451, 16
    %v3284 = vpop.permute.xlu0 %3283
    %3285 = vrot.lane.b32.xlu0 %v2587, 16
    %v3286 = vpop.permute.xlu0 %3285
    %3287 = vrot.lane.b32.xlu0 %v2658, 16
    %v3288 = vpop.permute.xlu0 %3287
    %3299 = vrot.lane.b32.xlu0 %v2180, 32
    %v3300 = vpop.permute.xlu0 %3299
    %3301 = vrot.lane.b32.xlu0 %v2316, 32
    %v3302 = vpop.permute.xlu0 %3301
    %3303 = vrot.lane.b32.xlu0 %v2452, 32
    %v3304 = vpop.permute.xlu0 %3303
    %3305 = vrot.lane.b32.xlu0 %v2588, 32
    %v3306 = vpop.permute.xlu0 %3305
    %3307 = vrot.lane.b32.xlu0 %v2641, 32
    %v3308 = vpop.permute.xlu0 %3307
    %3319 = vrot.lane.b32.xlu0 %v2181, 48
    %v3320 = vpop.permute.xlu0 %3319
    %3321 = vrot.lane.b32.xlu0 %v2317, 48
    %v3322 = vpop.permute.xlu0 %3321
    %3323 = vrot.lane.b32.xlu0 %v2453, 48
    %v3324 = vpop.permute.xlu0 %3323
    %3325 = vrot.lane.b32.xlu0 %v2589, 48
    %v3326 = vpop.permute.xlu0 %3325
    %3327 = vrot.lane.b32.xlu0 %v2659, 48
    %v3328 = vpop.permute.xlu0 %3327
    %3339 = vrot.lane.b32.xlu0 %v2182, 64
    %v3340 = vpop.permute.xlu0 %3339
    %3341 = vrot.lane.b32.xlu0 %v2318, 64
    %v3342 = vpop.permute.xlu0 %3341
    %3343 = vrot.lane.b32.xlu0 %v2454, 64
    %v3344 = vpop.permute.xlu0 %3343
    %3345 = vrot.lane.b32.xlu0 %v2590, 64
    %v3346 = vpop.permute.xlu0 %3345
    %3347 = vrot.lane.b32.xlu0 %v2650, 64
    %v3348 = vpop.permute.xlu0 %3347
    %3359 = vrot.lane.b32.xlu0 %v2183, 80
    %v3360 = vpop.permute.xlu0 %3359
    %3361 = vrot.lane.b32.xlu0 %v2319, 80
    %v3362 = vpop.permute.xlu0 %3361
    %3363 = vrot.lane.b32.xlu0 %v2455, 80
    %v3364 = vpop.permute.xlu0 %3363
    %3365 = vrot.lane.b32.xlu0 %v2591, 80
    %v3366 = vpop.permute.xlu0 %3365
    %3367 = vrot.lane.b32.xlu0 %v2660, 80
    %v3368 = vpop.permute.xlu0 %3367
    %3379 = vrot.lane.b32.xlu0 %v2184, 96
    %v3380 = vpop.permute.xlu0 %3379
    %3381 = vrot.lane.b32.xlu0 %v2320, 96
    %v3382 = vpop.permute.xlu0 %3381
    %3383 = vrot.lane.b32.xlu0 %v2456, 96
    %v3384 = vpop.permute.xlu0 %3383
    %3385 = vrot.lane.b32.xlu0 %v2592, 96
    %v3386 = vpop.permute.xlu0 %3385
    %3387 = vrot.lane.b32.xlu0 %v2657, 96
    %v3388 = vpop.permute.xlu0 %3387
    %3399 = vrot.lane.b32.xlu0 %v2185, 112
    %v3400 = vpop.permute.xlu0 %3399
    %3401 = vrot.lane.b32.xlu0 %v2321, 112
    %v3402 = vpop.permute.xlu0 %3401
    %3403 = vrot.lane.b32.xlu0 %v2457, 112
    %v3404 = vpop.permute.xlu0 %3403
    %3405 = vrot.lane.b32.xlu0 %v2593, 112
    %v3406 = vpop.permute.xlu0 %3405
    %3407 = vrot.lane.b32.xlu0 %v2661, 112
    %v3408 = vpop.permute.xlu0 %3407
    %3419 = vrot.lane.b32.xlu0 %v2791, 16
    %v3420 = vpop.permute.xlu0 %3419
    %3421 = vrot.lane.b32.xlu0 %v2927, 16
    %v3422 = vpop.permute.xlu0 %3421
    %3423 = vrot.lane.b32.xlu0 %v3063, 16
    %v3424 = vpop.permute.xlu0 %3423
    %3425 = vrot.lane.b32.xlu0 %v3199, 16
    %v3426 = vpop.permute.xlu0 %3425
    %3427 = vrot.lane.b32.xlu0 %v3270, 16
    %v3428 = vpop.permute.xlu0 %3427
    %3439 = vrot.lane.b32.xlu0 %v2792, 32
    %v3440 = vpop.permute.xlu0 %3439
    %3441 = vrot.lane.b32.xlu0 %v2928, 32
    %v3442 = vpop.permute.xlu0 %3441
    %3443 = vrot.lane.b32.xlu0 %v3064, 32
    %v3444 = vpop.permute.xlu0 %3443
    %3445 = vrot.lane.b32.xlu0 %v3200, 32
    %v3446 = vpop.permute.xlu0 %3445
    %3447 = vrot.lane.b32.xlu0 %v3253, 32
    %v3448 = vpop.permute.xlu0 %3447
    %3459 = vrot.lane.b32.xlu0 %v2793, 48
    %v3460 = vpop.permute.xlu0 %3459
    %3461 = vrot.lane.b32.xlu0 %v2929, 48
    %v3462 = vpop.permute.xlu0 %3461
    %3463 = vrot.lane.b32.xlu0 %v3065, 48
    %v3464 = vpop.permute.xlu0 %3463
    %3465 = vrot.lane.b32.xlu0 %v3201, 48
    %v3466 = vpop.permute.xlu0 %3465
    %3467 = vrot.lane.b32.xlu0 %v3271, 48
    %v3468 = vpop.permute.xlu0 %3467
    %3479 = vrot.lane.b32.xlu0 %v2794, 64
    %v3480 = vpop.permute.xlu0 %3479
    %3481 = vrot.lane.b32.xlu0 %v2930, 64
    %v3482 = vpop.permute.xlu0 %3481
    %3483 = vrot.lane.b32.xlu0 %v3066, 64
    %v3484 = vpop.permute.xlu0 %3483
    %3485 = vrot.lane.b32.xlu0 %v3202, 64
    %v3486 = vpop.permute.xlu0 %3485
    %3487 = vrot.lane.b32.xlu0 %v3262, 64
    %v3488 = vpop.permute.xlu0 %3487
    %3499 = vrot.lane.b32.xlu0 %v2795, 80
    %v3500 = vpop.permute.xlu0 %3499
    %3501 = vrot.lane.b32.xlu0 %v2931, 80
    %v3502 = vpop.permute.xlu0 %3501
    %3503 = vrot.lane.b32.xlu0 %v3067, 80
    %v3504 = vpop.permute.xlu0 %3503
    %3505 = vrot.lane.b32.xlu0 %v3203, 80
    %v3506 = vpop.permute.xlu0 %3505
    %3507 = vrot.lane.b32.xlu0 %v3272, 80
    %v3508 = vpop.permute.xlu0 %3507
    %3519 = vrot.lane.b32.xlu0 %v2796, 96
    %v3520 = vpop.permute.xlu0 %3519
    %3521 = vrot.lane.b32.xlu0 %v2932, 96
    %v3522 = vpop.permute.xlu0 %3521
    %3523 = vrot.lane.b32.xlu0 %v3068, 96
    %v3524 = vpop.permute.xlu0 %3523
    %3525 = vrot.lane.b32.xlu0 %v3204, 96
    %v3526 = vpop.permute.xlu0 %3525
    %3527 = vrot.lane.b32.xlu0 %v3269, 96
    %v3528 = vpop.permute.xlu0 %3527
    %3539 = vrot.lane.b32.xlu0 %v2797, 112
    %v3540 = vpop.permute.xlu0 %3539
    %3541 = vrot.lane.b32.xlu0 %v2933, 112
    %v3542 = vpop.permute.xlu0 %3541
    %3543 = vrot.lane.b32.xlu0 %v3069, 112
    %v3544 = vpop.permute.xlu0 %3543
    %3545 = vrot.lane.b32.xlu0 %v3205, 112
    %v3546 = vpop.permute.xlu0 %3545
    %3547 = vrot.lane.b32.xlu0 %v3273, 112
    %v3548 = vpop.permute.xlu0 %3547
    %v3554 = vsel %vm1748, %v2178, %v3280
    %v3555 = vsel %vm1748, %v2314, %v3282
    %v3556 = vsel %vm1748, %v2450, %v3284
    %v3557 = vsel %vm1748, %v2586, %v3286
    %v3558 = vsel %vm1748, %v2634, %v3288
    %v3559 = vsel %vm1754, %v3554, %v3300
    %v3560 = vsel %vm1754, %v3555, %v3302
    %v3561 = vsel %vm1754, %v3556, %v3304
    %v3562 = vsel %vm1754, %v3557, %v3306
    %v3563 = vsel %vm1754, %v3558, %v3308
    %v3564 = vsel %vm1760, %v3559, %v3320
    %v3565 = vsel %vm1760, %v3560, %v3322
    %v3566 = vsel %vm1760, %v3561, %v3324
    %v3567 = vsel %vm1760, %v3562, %v3326
    %v3568 = vsel %vm1760, %v3563, %v3328
    %v3569 = vsel %vm1766, %v3564, %v3340
    %v3570 = vsel %vm1766, %v3565, %v3342
    %v3571 = vsel %vm1766, %v3566, %v3344
    %v3572 = vsel %vm1766, %v3567, %v3346
    %v3573 = vsel %vm1766, %v3568, %v3348
    %v3574 = vsel %vm1772, %v3569, %v3360
    %v3575 = vsel %vm1772, %v3570, %v3362
    %v3576 = vsel %vm1772, %v3571, %v3364
    %v3577 = vsel %vm1772, %v3572, %v3366
    %v3578 = vsel %vm1772, %v3573, %v3368
    %v3579 = vsel %vm1778, %v3574, %v3380
    %v3580 = vsel %vm1778, %v3575, %v3382
    %v3581 = vsel %vm1778, %v3576, %v3384
    %v3582 = vsel %vm1778, %v3577, %v3386
    %v3583 = vsel %vm1778, %v3578, %v3388
    %v3584 = vsel %vm1784, %v3579, %v3400
    %v3585 = vsel %vm1784, %v3580, %v3402
    %v3586 = vsel %vm1784, %v3581, %v3404
    %v3587 = vsel %vm1784, %v3582, %v3406
    %v3588 = vsel %vm1784, %v3583, %v3408
    %v3589 = vsel %vm1748, %v2790, %v3420
    %v3590 = vsel %vm1748, %v2926, %v3422
    %v3591 = vsel %vm1748, %v3062, %v3424
    %v3592 = vsel %vm1748, %v3198, %v3426
    %v3593 = vsel %vm1748, %v3246, %v3428
    %v3594 = vsel %vm1754, %v3589, %v3440
    %v3595 = vsel %vm1754, %v3590, %v3442
    %v3596 = vsel %vm1754, %v3591, %v3444
    %v3597 = vsel %vm1754, %v3592, %v3446
    %v3598 = vsel %vm1754, %v3593, %v3448
    %v3599 = vsel %vm1760, %v3594, %v3460
    %v3600 = vsel %vm1760, %v3595, %v3462
    %v3601 = vsel %vm1760, %v3596, %v3464
    %v3602 = vsel %vm1760, %v3597, %v3466
    %v3603 = vsel %vm1760, %v3598, %v3468
    %v3604 = vsel %vm1766, %v3599, %v3480
    %v3605 = vsel %vm1766, %v3600, %v3482
    %v3606 = vsel %vm1766, %v3601, %v3484
    %v3607 = vsel %vm1766, %v3602, %v3486
    %v3608 = vsel %vm1766, %v3603, %v3488
    %v3609 = vsel %vm1772, %v3604, %v3500
    %v3610 = vsel %vm1772, %v3605, %v3502
    %v3611 = vsel %vm1772, %v3606, %v3504
    %v3612 = vsel %vm1772, %v3607, %v3506
    %v3613 = vsel %vm1772, %v3608, %v3508
    %v3614 = vsel %vm1778, %v3609, %v3520
    %v3615 = vsel %vm1778, %v3610, %v3522
    %v3616 = vsel %vm1778, %v3611, %v3524
    %v3617 = vsel %vm1778, %v3612, %v3526
    %v3618 = vsel %vm1778, %v3613, %v3528
    %v3619 = vsel %vm1784, %v3614, %v3540
    %v3620 = vsel %vm1784, %v3615, %v3542
    %v3621 = vsel %vm1784, %v3616, %v3544
    %v3622 = vsel %vm1784, %v3617, %v3546
    %v3623 = vsel %vm1784, %v3618, %v3548
    %v3624 = vld [vmem:[%s1] sm:$0xff]
    %vm3625 = vcmask 293888
    %v3627 = vsel %vm3625, %v3624, 0
    %vm3629 = vcmask 1043456
    %v3631 = vsel %vm3629, %v1789, 0
    %v3634 = vsel %vm3629, %v1824, 0
    %v3637 = vsel %vm3629, %v3588, 0
    %v3640 = vsel %vm3629, %v3623, 0
    %3642 = vmatprep.subr.mxu0 %v1820
    %3643 = vmatpush1.msra.mxu0 %v1785
    %3644 = vmatprep.subr.mxu0 %v1821
    %3645 = vmatpush1.msra.mxu0 %v1786
    %3646 = vmatprep.subr.mxu0 %v1822
    %3647 = vmatpush1.msra.mxu0 %v1787
    %3648 = vmatprep.subr.mxu0 %v1823
    %3649 = vmatpush1.msra.mxu0 %v1788
    %3650 = vmatprep.subr.mxu0 %v3634
    %3651 = vmatpush1.msra.mxu0 %v3631
    %3652 = vmatprep.subr.mxu0 0.0
    %3653 = vmatpush1.msra.mxu0 0.0
    %3654 = vmatprep.subr.mxu0 0.0
    %3655 = vmatpush1.msra.mxu0 0.0
    %3656 = vmatprep.subr.mxu0 0.0
    %3657 = vmatpush1.msra.mxu0 0.0
    %3658 = vmatprep.subr.mxu0 0.0
    %3659 = vmatpush1.msra.mxu0 0.0
    %3660 = vmatprep.subr.mxu0 0.0
    %3661 = vmatpush1.msra.mxu0 0.0
    %3662 = vmatprep.subr.mxu0 0.0
    %3663 = vmatpush1.msra.mxu0 0.0
    %3664 = vmatprep.subr.mxu0 0.0
    %3665 = vmatpush1.msra.mxu0 0.0
    %3666 = vmatprep.subr.mxu0 0.0
    %3667 = vmatpush1.msra.mxu0 0.0
    %3668 = vmatprep.subr.mxu0 0.0
    %3669 = vmatpush1.msra.mxu0 0.0
    %3670 = vmatprep.subr.mxu0 0.0
    %3671 = vmatpush1.msra.mxu0 0.0
    %3672 = vmatprep.subr.mxu0 0.0
    %3673 = vmatpush1.msra.mxu0 0.0
    %3674 = vmatprep.subr.mxu0 0.0
    %3675 = vmatpush1.msra.mxu0 0.0
    %3676 = vmatprep.subr.mxu0 0.0
    %3677 = vmatpush1.msra.mxu0 0.0
    %3678 = vmatprep.subr.mxu0 0.0
    %3679 = vmatpush1.msra.mxu0 0.0
    %3680 = vmatprep.subr.mxu0 0.0
    %3681 = vmatpush1.msra.mxu0 0.0
    %3682 = vmatprep.subr.mxu0 0.0
    %3683 = vmatpush1.msra.mxu0 0.0
    %3684 = vmatprep.subr.mxu0 0.0
    %3685 = vmatpush1.msra.mxu0 0.0
    %3686 = vmatprep.subr.mxu0 0.0
    %3687 = vmatpush1.msra.mxu0 0.0
    %3688 = vmatprep.subr.mxu0 0.0
    %3689 = vmatpush1.msra.mxu0 0.0
    %3690 = vmatprep.subr.mxu0 0.0
    %3691 = vmatpush1.msra.mxu0 0.0
    %3692 = vmatprep.subr.mxu0 0.0
    %3693 = vmatpush1.msra.mxu0 0.0
    %3694 = vmatprep.subr.mxu0 0.0
    %3695 = vmatpush1.msra.mxu0 0.0
    %3696 = vmatprep.subr.mxu0 0.0
    %3697 = vmatpush1.msra.mxu0 0.0
    %3698 = vmatprep.subr.mxu0 0.0
    %3699 = vmatpush1.msra.mxu0 0.0
    %3700 = vmatprep.subr.mxu0 0.0
    %3701 = vmatpush1.msra.mxu0 0.0
    %3702 = vmatprep.subr.mxu0 0.0
    %3703 = vmatpush1.msra.mxu0 0.0
    %3704 = vmatprep.subr.mxu0 0.0
    %3705 = vmatpush1.msra.mxu0 0.0
    %3706 = vmatprep.mubr.f32.mxu0 0.0
    %3707 = vmatmul.mubr.f32.gmra.mrb[0].mxu0 %v3627
    %v3708 = vpop.f32.mrb[0].mxu0
    %v3709 = vadd.f32 0.0, %v3708
    %v3710 = vpop.f32.mrb[0].mxu0
    %v3711 = vadd.f32 0.0, %v3710
    %3712 = vdwg.mxu0
    %3713 = vmatprep.subr.mxu0 %v3619
    %3714 = vmatpush1.msra.mxu0 %v3584
    %3715 = vmatprep.subr.mxu0 %v3620
    %3716 = vmatpush1.msra.mxu0 %v3585
    %3717 = vmatprep.subr.mxu0 %v3621
    %3718 = vmatpush1.msra.mxu0 %v3586
    %3719 = vmatprep.subr.mxu0 %v3622
    %3720 = vmatpush1.msra.mxu0 %v3587
    %3721 = vmatprep.subr.mxu0 %v3640
    %3722 = vmatpush1.msra.mxu0 %v3637
    %3723 = vmatprep.subr.mxu0 0.0
    %3724 = vmatpush1.msra.mxu0 0.0
    %3725 = vmatprep.subr.mxu0 0.0
    %3726 = vmatpush1.msra.mxu0 0.0
    %3727 = vmatprep.subr.mxu0 0.0
    %3728 = vmatpush1.msra.mxu0 0.0
    %3729 = vmatprep.subr.mxu0 0.0
    %3730 = vmatpush1.msra.mxu0 0.0
    %3731 = vmatprep.subr.mxu0 0.0
    %3732 = vmatpush1.msra.mxu0 0.0
    %3733 = vmatprep.subr.mxu0 0.0
    %3734 = vmatpush1.msra.mxu0 0.0
    %3735 = vmatprep.subr.mxu0 0.0
    %3736 = vmatpush1.msra.mxu0 0.0
    %3737 = vmatprep.subr.mxu0 0.0
    %3738 = vmatpush1.msra.mxu0 0.0
    %3739 = vmatprep.subr.mxu0 0.0
    %3740 = vmatpush1.msra.mxu0 0.0
    %3741 = vmatprep.subr.mxu0 0.0
    %3742 = vmatpush1.msra.mxu0 0.0
    %3743 = vmatprep.subr.mxu0 0.0
    %3744 = vmatpush1.msra.mxu0 0.0
    %3745 = vmatprep.subr.mxu0 0.0
    %3746 = vmatpush1.msra.mxu0 0.0
    %3747 = vmatprep.subr.mxu0 0.0
    %3748 = vmatpush1.msra.mxu0 0.0
    %3749 = vmatprep.subr.mxu0 0.0
    %3750 = vmatpush1.msra.mxu0 0.0
    %3751 = vmatprep.subr.mxu0 0.0
    %3752 = vmatpush1.msra.mxu0 0.0
    %3753 = vmatprep.subr.mxu0 0.0
    %3754 = vmatpush1.msra.mxu0 0.0
    %3755 = vmatprep.subr.mxu0 0.0
    %3756 = vmatpush1.msra.mxu0 0.0
    %3757 = vmatprep.subr.mxu0 0.0
    %3758 = vmatpush1.msra.mxu0 0.0
    %3759 = vmatprep.subr.mxu0 0.0
    %3760 = vmatpush1.msra.mxu0 0.0
    %3761 = vmatprep.subr.mxu0 0.0
    %3762 = vmatpush1.msra.mxu0 0.0
    %3763 = vmatprep.subr.mxu0 0.0
    %3764 = vmatpush1.msra.mxu0 0.0
    %3765 = vmatprep.subr.mxu0 0.0
    %3766 = vmatpush1.msra.mxu0 0.0
    %3767 = vmatprep.subr.mxu0 0.0
    %3768 = vmatpush1.msra.mxu0 0.0
    %3769 = vmatprep.subr.mxu0 0.0
    %3770 = vmatpush1.msra.mxu0 0.0
    %3771 = vmatprep.subr.mxu0 0.0
    %3772 = vmatpush1.msra.mxu0 0.0
    %3773 = vmatprep.subr.mxu0 0.0
    %3774 = vmatpush1.msra.mxu0 0.0
    %3775 = vmatprep.subr.mxu0 0.0
    %3776 = vmatpush1.msra.mxu0 0.0
    %3777 = vmatprep.mubr.f32.mxu0 0.0
    %3778 = vmatmul.mubr.f32.gmra.mrb[0].mxu0 %v3627
    %v3779 = vpop.f32.mrb[0].mxu0
    %v3780 = vadd.f32 0.0, %v3779
    %v3781 = vpop.f32.mrb[0].mxu0
    %v3782 = vadd.f32 0.0, %v3781
    %3783 = vdwg.mxu0
    %v3784 = vadd.f32 %v3709, %v3711
    %v3785 = vadd.f32 %v3784, %v3780
    %v3786 = vadd.f32 %v3785, %v3782
    %3787 = vadd.xlane.f32.xlu0 %v3786
    %v3788 = vpop.xlane.xlu0 %3787
    %v3789 = vrcp.pop 512.0
    %v3790 = vmul.f32 %v3788, %v3789
    %v3791 = vsub.f32 %v3709, %v3790
    %v3792 = vsub.f32 %v3711, %v3790
    %v3793 = vsub.f32 %v3780, %v3790
    %v3794 = vsub.f32 %v3782, %v3790
    %v3795 = vmul.f32 %v3791, %v3791
    %v3796 = vmul.f32 %v3792, %v3792
    %v3797 = vmul.f32 %v3793, %v3793
    %v3798 = vmul.f32 %v3794, %v3794
    %v3799 = vadd.f32 %v3795, %v3796
    %v3800 = vadd.f32 %v3799, %v3797
    %v3801 = vadd.f32 %v3800, %v3798
    %3802 = vadd.xlane.f32.xlu0 %v3801
    %v3803 = vpop.xlane.xlu0 %3802
    %v3804 = vmul.f32 %v3803, %v3789
    %v3805 = vld [vmem:[%s2] sm:$0xff]
    %v3806 = vadd.f32 %v3804, 1e-05
    %v3807 = vrsqrt.pop %v3806
    %v3808 = vmul.f32 %v3805, %v3807
    %3810 = vset.pattern.permute.xlu0 0
    %3811 = vperm.xlu0 %3810, %v3808
    %v3812 = vpop.permute.xlu0 %3811
    %v3814 = vmul.f32 %v3791, %v3812
    %v3815 = vmul.f32 %v3792, %v3812
    %v3816 = vmul.f32 %v3793, %v3812
    %v3817 = vmul.f32 %v3794, %v3812
    %v3818 = vld [vmem:[%s3] sm:$0xff]
    %3820 = vset.pattern.permute.xlu0 0
    %3821 = vperm.xlu0 %3820, %v3818
    %v3822 = vpop.permute.xlu0 %3821
    %v3824 = vadd.f32 %v3814, %v3822
    %v3825 = vadd.f32 %v3815, %v3822
    %v3826 = vadd.f32 %v3816, %v3822
    %v3827 = vadd.f32 %v3817, %v3822
    %v3828 = vmax.f32 %v3824, 0.0
    %v3829 = vmax.f32 %v3825, 0.0
    %v3830 = vmax.f32 %v3826, 0.0
    %v3831 = vmax.f32 %v3827, 0.0
    %3832 = vst [vmem:[#allocation2] sm:$0xff] %v3828
    %3833 = vst [vmem:[#allocation2 + $0x8] sm:$0xff] %v3829
    %s3834 = scalar_lea.vmem [#allocation2], 16
    %3835 = vst [vmem:[%s3834] sm:$0xff] %v3830
    %3836 = vst [vmem:[%s3834 + $0x8] sm:$0xff] %v3831
    // Predicated region
    $region18: #{tpu_custom_call.1} parent=1 // pred_check
      _
    $region19: #{tpu_custom_call.1} parent=1 // pred_check_branch
      %3838 = sbr.rel (0) target = $region21
    $region20: #{tpu_custom_call.1} parent=1 // pred_region
      %s3840 = ssub.s32 512, 512
      %3841 = vsyncadd [#allocation3], %s3840
      %s3842 = sshll.u32 [#allocation2], 4
      %s3843 = int_to_ptr.vmem [resolvable:$true] %s3842
      %3848 = dma.vmem_to_hbm [thread:$0]  %s3843, 512, %s4, [#allocation3], 256, 256, 16
    $region21: #{tpu_custom_call.1} parent=1 // pred_fallthru
      _
    // Predicated region
    $region22: #{tpu_custom_call.1} parent=1 // pred_check
      _
    $region23: #{tpu_custom_call.1} parent=1 // pred_check_branch
      %3850 = sbr.rel (0) target = $region25
    $region24: #{tpu_custom_call.1} parent=1 // pred_region
      %3851 = dma.done [#allocation3], 512
    $region25: #{tpu_custom_call.1} parent=1 // pred_fallthru
      _
    %3852 = vsyncpa [#allocation3], 1

</llo_original>
